<compile_context>
chip_gen: v5e
topology: v5e:2x2
jax: 0.10.0
libtpu: 0.0.40
codegen_flags: <defaults>
</compile_context>

<pallas_src>
import jax
import jax.numpy as jnp
from jax import lax
from jax.experimental import pallas as pl
from jax.experimental.pallas import tpu as pltpu


def fce_kernel(f_ref, g_ref, wif_t_ref, wir_t_ref, whh_ref, b_ref, h_out_ref):
    f = f_ref[...]                    # (Bb, N, D)  f32
    G = g_ref[...]                    # (Bb, K, D)  f32
    W_if_T = wif_t_ref[...]           # (D, 4D)     bf16   f-facing half of W_ih, transposed
    W_ir_T = wir_t_ref[...]           # (D, 4D)     bf16   r-facing half of W_ih, transposed
    W_hh = whh_ref[...]               # (4D, D)     bf16   PyTorch layout (un-transposed)
    b = b_ref[...]                    # (1, 4D)     f32    b_ih + b_hh

    Bb, N, D = f.shape
    K = G.shape[1]

    # -------- loop-invariant precompute, hoisted off the serial recurrence --------
    # gates_f = f @ W_if.T + b : shared-weight matmul on flattened rows (one push).
    gates_f = (jnp.dot(f.reshape(Bb * N, D).astype(jnp.bfloat16), W_if_T,
                       preferred_element_type=jnp.float32) + b
               ).reshape(Bb, N, 4 * D)                                    # (Bb, N, 4D) f32

    # GW = G @ W_ir.T per episode: the read-out matmul (a@G)@W_ir.T folded into
    # a single per-step push a @ GW.
    GW = jnp.dot(G.reshape(Bb * K, D).astype(jnp.bfloat16), W_ir_T,
                 preferred_element_type=jnp.float32
                 ).reshape(Bb, K, 4 * D).astype(jnp.bfloat16)             # (Bb, K, 4D) bf16

    # Merged h-facing operand: HG = [W_hh ; G] stacked on the output axis so ONE
    # einsum per step yields both h@W_hh.T and the attention logits h@G.T.
    # W_hh first -> the 4D/K split sits exactly on the 128-lane vreg boundary.
    Gb = G.astype(jnp.bfloat16)
    HG = jnp.concatenate(
        [jnp.broadcast_to(W_hh[None], (Bb, 4 * D, D)), Gb], axis=1)       # (Bb, 4D+K, D) bf16

    h0 = f                            # h = f
    c0 = jnp.zeros_like(f)            # c = 0 expanded

    def body(_, carry):
        h, c = carry
        hb = h.astype(jnp.bfloat16)
        # One MXU push per episode covering LSTM hidden path + attention logits.
        hw = jnp.einsum('bnd,bfd->bnf', hb, HG,
                        preferred_element_type=jnp.float32)               # (Bb, N, 4D+K)
        h_Whh = hw[..., :4 * D]                                           # (Bb, N, 4D)
        logit = hw[..., 4 * D:]                                           # (Bb, N, K)

        # Softmax reassociated: push e @ GW first, normalize afterwards so the
        # EUP reciprocal overlaps the MXU instead of sitting on the chain.
        m = jnp.max(logit, axis=-1, keepdims=True)
        e = jnp.exp(logit - m)                                            # (Bb, N, K)
        u = jnp.einsum('bnk,bkf->bnf', e.astype(jnp.bfloat16), GW,
                       preferred_element_type=jnp.float32)                # (Bb, N, 4D)
        inv = pl.reciprocal(jnp.sum(e, axis=-1, keepdims=True), approx=True)

        gates = gates_f + u * inv + h_Whh                                 # (Bb, N, 4D)
        # Exact sigmoid via the tanh identity (single EUP push, no approx recip).
        s = 0.5 + 0.5 * jnp.tanh(0.5 * gates)
        i_g = s[..., 0 * D:1 * D]
        f_g = s[..., 1 * D:2 * D]
        o_g = s[..., 3 * D:4 * D]
        g_g = jnp.tanh(gates[..., 2 * D:3 * D])
        c_new = f_g * c + i_g * g_g
        h_new = o_g * jnp.tanh(c_new) + f                                 # residual
        return (h_new, c_new)

    # K is small & static: full unroll gives the scheduler cross-iteration
    # visibility (cap the unroll factor if K ever grows large).
    h_final, _ = lax.fori_loop(0, K, body, (h0, c0), unroll=True)
    h_out_ref[...] = h_final.astype(h_out_ref.dtype)


def fully_contextual_embedding_batched(f, G, W_ih, W_hh, b_ih, b_hh, *, num_blocks=None):
    """f: (B, N, D), G: (B, K, D); LSTMCell weights in PyTorch layout."""
    B, N, D = f.shape
    K = G.shape[1]
    if num_blocks is None:
        # Two blocks keep both TensorCores busy on v7x; on v5e/v6e the
        # "parallel" marking is a no-op and the win comes from batching itself.
        num_blocks = 2 if (B > 1 and B % 2 == 0) else 1
    assert B % num_blocks == 0, "episode count must divide evenly into blocks"
    Bb = B // num_blocks

    # One-time weight prep in plain XLA, amortized over all episodes & K steps.
    # bf16 operands -> single-pass MXU matmuls; accumulation stays f32 in-kernel.
    W_if_T = W_ih[:, :D].T.astype(jnp.bfloat16)      # (D, 4D)
    W_ir_T = W_ih[:, D:].T.astype(jnp.bfloat16)      # (D, 4D)
    W_hh_b = W_hh.astype(jnp.bfloat16)               # (4D, D)  un-transposed
    b = (b_ih + b_hh).reshape(1, 4 * D).astype(jnp.float32)

    grid_spec = pltpu.PrefetchScalarGridSpec(
        num_scalar_prefetch=0,
        grid=(num_blocks,),   # one block of Bb episodes per grid step
        in_specs=[
            pl.BlockSpec((Bb, N, D), lambda i: (i, 0, 0)),
            pl.BlockSpec((Bb, K, D), lambda i: (i, 0, 0)),
            # Constant-index weight blocks are revisited with the same block
            # index every grid step (no re-DMA); single-buffering them only
            # matters if D scales to production widths.
            pl.BlockSpec((D, 4 * D), lambda i: (0, 0)),
            pl.BlockSpec((D, 4 * D), lambda i: (0, 0)),
            pl.BlockSpec((4 * D, D), lambda i: (0, 0)),
            pl.BlockSpec((1, 4 * D), lambda i: (0, 0)),
        ],
        out_specs=pl.BlockSpec((Bb, N, D), lambda i: (i, 0, 0)),
    )
    return pl.pallas_call(
        fce_kernel,
        out_shape=jax.ShapeDtypeStruct((B, N, D), f.dtype),
        grid_spec=grid_spec,
        compiler_params=pltpu.CompilerParams(
            dimension_semantics=("parallel",)),
    )(f, G, W_if_T, W_ir_T, W_hh_b, b)


def fully_contextual_embedding(f, G, W_ih, W_hh, b_ih, b_hh):
    """Single-episode API matching the PyTorch module's forward(f, G)."""
    return fully_contextual_embedding_batched(
        f[None], G[None], W_ih, W_hh, b_ih, b_hh)[0]


def reference(f, G, W_ih, W_hh, b_ih, b_hh):
    """Pure-JAX f32 reference reproducing the PyTorch forward (one episode)."""
    D = f.shape[1]
    h = f
    c = jnp.zeros_like(f)
    for _ in range(G.shape[0]):
        a = jax.nn.softmax(h @ G.T, axis=1)
        r = a @ G
        x = jnp.concatenate([f, r], axis=1)
        gates = x @ W_ih.T + b_ih + h @ W_hh.T + b_hh
        i_g = jax.nn.sigmoid(gates[:, 0 * D:1 * D])
        f_g = jax.nn.sigmoid(gates[:, 1 * D:2 * D])
        g_g = jnp.tanh(gates[:, 2 * D:3 * D])
        o_g = jax.nn.sigmoid(gates[:, 3 * D:4 * D])
        c = f_g * c + i_g * g_g
        h = o_g * jnp.tanh(c) + f
    return h


if __name__ == "__main__":
    feat_dim = 32    # D
    n_query = 8      # N (rows of f)
    n_support = 8    # K (rows of G)
    n_episodes = 4   # B (episodes batched into one pallas_call, 2 per block)

    key = jax.random.PRNGKey(0)
    k_f, k_g, k_wih, k_whh, k_bih, k_bhh = jax.random.split(key, 6)

    f = jax.random.normal(k_f, (n_episodes, n_query, feat_dim), dtype=jnp.float32)
    G = jax.random.normal(k_g, (n_episodes, n_support, feat_dim), dtype=jnp.float32)

    scale = 1.0 / jnp.sqrt(jnp.float32(feat_dim))
    W_ih = jax.random.uniform(k_wih, (4 * feat_dim, 2 * feat_dim),
                              minval=-scale, maxval=scale, dtype=jnp.float32)
    W_hh = jax.random.uniform(k_whh, (4 * feat_dim, feat_dim),
                              minval=-scale, maxval=scale, dtype=jnp.float32)
    b_ih = jax.random.uniform(k_bih, (1, 4 * feat_dim),
                              minval=-scale, maxval=scale, dtype=jnp.float32)
    b_hh = jax.random.uniform(k_bhh, (1, 4 * feat_dim),
                              minval=-scale, maxval=scale, dtype=jnp.float32)

    out = fully_contextual_embedding_batched(f, G, W_ih, W_hh, b_ih, b_hh)
    out = jax.block_until_ready(out)
    assert out.shape == (n_episodes, n_query, feat_dim)

    ref = jax.vmap(reference, in_axes=(0, 0, None, None, None, None))(
        f, G, W_ih, W_hh, b_ih, b_hh)
    # Gate sigmoid is exact now; remaining drift vs the f32 reference comes from
    # single-pass bf16 MXU operands (+ the approx softmax denominator),
    # compounded through the K-step recurrence.
    assert jnp.allclose(out, ref, atol=3e-2, rtol=2e-2), \
        float(jnp.max(jnp.abs(out - ref)))

    # single-episode API parity with the PyTorch module
    out0 = fully_contextual_embedding(f[0], G[0], W_ih, W_hh, b_ih, b_hh)
    out0 = jax.block_until_ready(out0)
    assert out0.shape == (n_query, feat_dim)
    assert jnp.allclose(out0, ref[0], atol=3e-2, rtol=2e-2)

    print("KERNEL_OK")
</pallas_src>

<mosaic_0001>
module attributes {stable_mosaic.version = 11 : i64} {
  func.func @fce_kernel(%arg0: i32, %arg1: memref<2x8x32xf32, #tpu.memory_space<vmem>>, %arg2: memref<2x8x32xf32, #tpu.memory_space<vmem>>, %arg3: memref<32x128xbf16, #tpu.memory_space<vmem>>, %arg4: memref<32x128xbf16, #tpu.memory_space<vmem>>, %arg5: memref<128x32xbf16, #tpu.memory_space<vmem>>, %arg6: memref<1x128xf32, #tpu.memory_space<vmem>>, %arg7: memref<2x8x32xf32, #tpu.memory_space<vmem>>) attributes {dimension_semantics = [#tpu.dimension_semantics<parallel>], iteration_bounds = array<i64: 2>, scalar_prefetch = 0 : i64, scratch_operands = 0 : i64, tpu.core_type = #tpu.core_type<tc>, window_params = [{transform_indices = @transform_0, window_bounds = array<i64: 2, 8, 32>}, {transform_indices = @transform_1, window_bounds = array<i64: 2, 8, 32>}, {pipeline_mode = #tpu.pipeline_mode<synchronous>, transform_indices = @transform_2, window_bounds = array<i64: 32, 128>}, {pipeline_mode = #tpu.pipeline_mode<synchronous>, transform_indices = @transform_3, window_bounds = array<i64: 32, 128>}, {pipeline_mode = #tpu.pipeline_mode<synchronous>, transform_indices = @transform_4, window_bounds = array<i64: 128, 32>}, {pipeline_mode = #tpu.pipeline_mode<synchronous>, transform_indices = @transform_5, window_bounds = array<i64: 1, 128>}, {transform_indices = @transform_6, window_bounds = array<i64: 2, 8, 32>}]} {
    %c0 = arith.constant 0 : index
    %c0_0 = arith.constant 0 : index
    %c0_1 = arith.constant 0 : index
    %0 = vector.load %arg1[%c0, %c0_0, %c0_1] : memref<2x8x32xf32, #tpu.memory_space<vmem>>, vector<2x8x32xf32>
    %c0_2 = arith.constant 0 : index
    %c0_3 = arith.constant 0 : index
    %c0_4 = arith.constant 0 : index
    %1 = vector.load %arg2[%c0_2, %c0_3, %c0_4] : memref<2x8x32xf32, #tpu.memory_space<vmem>>, vector<2x8x32xf32>
    %c0_5 = arith.constant 0 : index
    %c0_6 = arith.constant 0 : index
    %2 = vector.load %arg3[%c0_5, %c0_6] : memref<32x128xbf16, #tpu.memory_space<vmem>>, vector<32x128xbf16>
    %c0_7 = arith.constant 0 : index
    %c0_8 = arith.constant 0 : index
    %3 = vector.load %arg4[%c0_7, %c0_8] : memref<32x128xbf16, #tpu.memory_space<vmem>>, vector<32x128xbf16>
    %c0_9 = arith.constant 0 : index
    %c0_10 = arith.constant 0 : index
    %4 = vector.load %arg5[%c0_9, %c0_10] : memref<128x32xbf16, #tpu.memory_space<vmem>>, vector<128x32xbf16>
    %c0_11 = arith.constant 0 : index
    %c0_12 = arith.constant 0 : index
    %5 = vector.load %arg6[%c0_11, %c0_12] : memref<1x128xf32, #tpu.memory_space<vmem>>, vector<1x128xf32>
    %6 = vector.shape_cast %0 : vector<2x8x32xf32> to vector<16x32xf32>
    %7 = arith.truncf %6 : vector<16x32xf32> to vector<16x32xbf16>
    %cst = arith.constant dense<0.000000e+00> : vector<16x128xf32>
    %8 = tpu.matmul %7, %2, %cst {dimension_numbers = #tpu.dot_dimension_numbers<[1], [0], [0], [1], [0, 0, 1, 1], [], []>} : vector<16x32xbf16>, vector<32x128xbf16>, vector<16x128xf32> -> vector<16x128xf32>
    %9 = vector.broadcast %5 : vector<1x128xf32> to vector<16x128xf32>
    %10 = arith.addf %8, %9 : vector<16x128xf32>
    %11 = vector.shape_cast %10 : vector<16x128xf32> to vector<2x8x128xf32>
    %12 = vector.shape_cast %1 : vector<2x8x32xf32> to vector<16x32xf32>
    %13 = arith.truncf %12 : vector<16x32xf32> to vector<16x32xbf16>
    %cst_13 = arith.constant dense<0.000000e+00> : vector<16x128xf32>
    %14 = tpu.matmul %13, %3, %cst_13 {dimension_numbers = #tpu.dot_dimension_numbers<[1], [0], [0], [1], [0, 0, 1, 1], [], []>} : vector<16x32xbf16>, vector<32x128xbf16>, vector<16x128xf32> -> vector<16x128xf32>
    %15 = vector.shape_cast %14 : vector<16x128xf32> to vector<2x8x128xf32>
    %16 = arith.truncf %15 : vector<2x8x128xf32> to vector<2x8x128xbf16>
    %17 = arith.truncf %1 : vector<2x8x32xf32> to vector<2x8x32xbf16>
    %18 = vector.shape_cast %4 : vector<128x32xbf16> to vector<1x128x32xbf16>
    %19 = vector.shape_cast %18 : vector<1x128x32xbf16> to vector<1x128x32xbf16>
    %20 = vector.broadcast %19 : vector<1x128x32xbf16> to vector<2x128x32xbf16>
    %21 = tpu.concatenate %20, %17 in 1 : vector<2x128x32xbf16>, vector<2x8x32xbf16> -> vector<2x136x32xbf16>
    %cst_14 = arith.constant 0.000000e+00 : f32
    %22 = vector.broadcast %cst_14 : f32 to vector<2x8x32xf32>
    %c0_i32 = arith.constant 0 : i32
    %23 = arith.truncf %0 : vector<2x8x32xf32> to vector<2x8x32xbf16>
    "tpu.trace_start"() <{level = 10 : i32, message = "bnd,bfd->bnf"}> : () -> ()
    %cst_15 = arith.constant dense<0.000000e+00> : vector<2x8x136xf32>
    %24 = tpu.matmul %23, %21, %cst_15 {dimension_numbers = #tpu.dot_dimension_numbers<[2], [2], [1], [1], [0, 0, 0, 1, 1, 1], [0], [0]>} : vector<2x8x32xbf16>, vector<2x136x32xbf16>, vector<2x8x136xf32> -> vector<2x8x136xf32>
    "tpu.trace_stop"() : () -> ()
    %25 = vector.extract_strided_slice %24 {offsets = [0, 0, 0], sizes = [2, 8, 128], strides = [1, 1, 1]} : vector<2x8x136xf32> to vector<2x8x128xf32>
    %26 = vector.extract_strided_slice %24 {offsets = [0, 0, 128], sizes = [2, 8, 8], strides = [1, 1, 1]} : vector<2x8x136xf32> to vector<2x8x8xf32>
    %cst_16 = arith.constant dense<0xFF800000> : vector<2x8xf32>
    %27 = vector.multi_reduction <maximumf>, %26, %cst_16 [2] : vector<2x8x8xf32> to vector<2x8xf32>
    %28 = vector.shape_cast %27 : vector<2x8xf32> to vector<2x8x1xf32>
    %29 = vector.broadcast %28 : vector<2x8x1xf32> to vector<2x8x8xf32>
    %30 = arith.subf %26, %29 : vector<2x8x8xf32>
    %31 = math.exp %30 : vector<2x8x8xf32>
    %32 = arith.truncf %31 : vector<2x8x8xf32> to vector<2x8x8xbf16>
    "tpu.trace_start"() <{level = 10 : i32, message = "bnk,bkf->bnf"}> : () -> ()
    %cst_17 = arith.constant dense<0.000000e+00> : vector<2x8x128xf32>
    %33 = tpu.matmul %32, %16, %cst_17 {dimension_numbers = #tpu.dot_dimension_numbers<[2], [1], [1], [2], [0, 0, 0, 1, 1, 2], [0], [0]>} : vector<2x8x8xbf16>, vector<2x8x128xbf16>, vector<2x8x128xf32> -> vector<2x8x128xf32>
    "tpu.trace_stop"() : () -> ()
    %cst_18 = arith.constant dense<0.000000e+00> : vector<2x8xf32>
    %34 = vector.multi_reduction <add>, %31, %cst_18 [2] : vector<2x8x8xf32> to vector<2x8xf32>
    %35 = vector.shape_cast %34 : vector<2x8xf32> to vector<2x8x1xf32>
    %36 = tpu.reciprocal %35 {approx = true} : vector<2x8x1xf32> -> vector<2x8x1xf32>
    %37 = vector.broadcast %36 : vector<2x8x1xf32> to vector<2x8x128xf32>
    %38 = arith.mulf %33, %37 : vector<2x8x128xf32>
    %39 = arith.addf %11, %38 : vector<2x8x128xf32>
    %40 = arith.addf %39, %25 : vector<2x8x128xf32>
    %cst_19 = arith.constant 5.000000e-01 : f32
    %41 = vector.broadcast %cst_19 : f32 to vector<2x8x128xf32>
    %42 = arith.mulf %41, %40 : vector<2x8x128xf32>
    %43 = math.tanh %42 : vector<2x8x128xf32>
    %cst_20 = arith.constant 5.000000e-01 : f32
    %44 = vector.broadcast %cst_20 : f32 to vector<2x8x128xf32>
    %45 = arith.mulf %44, %43 : vector<2x8x128xf32>
    %cst_21 = arith.constant 5.000000e-01 : f32
    %46 = vector.broadcast %cst_21 : f32 to vector<2x8x128xf32>
    %47 = arith.addf %46, %45 : vector<2x8x128xf32>
    %48 = vector.extract_strided_slice %47 {offsets = [0, 0, 0], sizes = [2, 8, 32], strides = [1, 1, 1]} : vector<2x8x128xf32> to vector<2x8x32xf32>
    %49 = vector.extract_strided_slice %47 {offsets = [0, 0, 32], sizes = [2, 8, 32], strides = [1, 1, 1]} : vector<2x8x128xf32> to vector<2x8x32xf32>
    %50 = vector.extract_strided_slice %47 {offsets = [0, 0, 96], sizes = [2, 8, 32], strides = [1, 1, 1]} : vector<2x8x128xf32> to vector<2x8x32xf32>
    %51 = vector.extract_strided_slice %40 {offsets = [0, 0, 64], sizes = [2, 8, 32], strides = [1, 1, 1]} : vector<2x8x128xf32> to vector<2x8x32xf32>
    %52 = math.tanh %51 : vector<2x8x32xf32>
    %53 = arith.mulf %49, %22 : vector<2x8x32xf32>
    %54 = arith.mulf %48, %52 : vector<2x8x32xf32>
    %55 = arith.addf %53, %54 : vector<2x8x32xf32>
    %56 = math.tanh %55 : vector<2x8x32xf32>
    %57 = arith.mulf %50, %56 : vector<2x8x32xf32>
    %58 = arith.addf %57, %0 : vector<2x8x32xf32>
    %c1_i32 = arith.constant 1 : i32
    %59 = arith.truncf %58 : vector<2x8x32xf32> to vector<2x8x32xbf16>
    "tpu.trace_start"() <{level = 10 : i32, message = "bnd,bfd->bnf"}> : () -> ()
    %cst_22 = arith.constant dense<0.000000e+00> : vector<2x8x136xf32>
    %60 = tpu.matmul %59, %21, %cst_22 {dimension_numbers = #tpu.dot_dimension_numbers<[2], [2], [1], [1], [0, 0, 0, 1, 1, 1], [0], [0]>} : vector<2x8x32xbf16>, vector<2x136x32xbf16>, vector<2x8x136xf32> -> vector<2x8x136xf32>
    "tpu.trace_stop"() : () -> ()
    %61 = vector.extract_strided_slice %60 {offsets = [0, 0, 0], sizes = [2, 8, 128], strides = [1, 1, 1]} : vector<2x8x136xf32> to vector<2x8x128xf32>
    %62 = vector.extract_strided_slice %60 {offsets = [0, 0, 128], sizes = [2, 8, 8], strides = [1, 1, 1]} : vector<2x8x136xf32> to vector<2x8x8xf32>
    %cst_23 = arith.constant dense<0xFF800000> : vector<2x8xf32>
    %63 = vector.multi_reduction <maximumf>, %62, %cst_23 [2] : vector<2x8x8xf32> to vector<2x8xf32>
    %64 = vector.shape_cast %63 : vector<2x8xf32> to vector<2x8x1xf32>
    %65 = vector.broadcast %64 : vector<2x8x1xf32> to vector<2x8x8xf32>
    %66 = arith.subf %62, %65 : vector<2x8x8xf32>
    %67 = math.exp %66 : vector<2x8x8xf32>
    %68 = arith.truncf %67 : vector<2x8x8xf32> to vector<2x8x8xbf16>
    "tpu.trace_start"() <{level = 10 : i32, message = "bnk,bkf->bnf"}> : () -> ()
    %cst_24 = arith.constant dense<0.000000e+00> : vector<2x8x128xf32>
    %69 = tpu.matmul %68, %16, %cst_24 {dimension_numbers = #tpu.dot_dimension_numbers<[2], [1], [1], [2], [0, 0, 0, 1, 1, 2], [0], [0]>} : vector<2x8x8xbf16>, vector<2x8x128xbf16>, vector<2x8x128xf32> -> vector<2x8x128xf32>
    "tpu.trace_stop"() : () -> ()
    %cst_25 = arith.constant dense<0.000000e+00> : vector<2x8xf32>
    %70 = vector.multi_reduction <add>, %67, %cst_25 [2] : vector<2x8x8xf32> to vector<2x8xf32>
    %71 = vector.shape_cast %70 : vector<2x8xf32> to vector<2x8x1xf32>
    %72 = tpu.reciprocal %71 {approx = true} : vector<2x8x1xf32> -> vector<2x8x1xf32>
    %73 = vector.broadcast %72 : vector<2x8x1xf32> to vector<2x8x128xf32>
    %74 = arith.mulf %69, %73 : vector<2x8x128xf32>
    %75 = arith.addf %11, %74 : vector<2x8x128xf32>
    %76 = arith.addf %75, %61 : vector<2x8x128xf32>
    %cst_26 = arith.constant 5.000000e-01 : f32
    %77 = vector.broadcast %cst_26 : f32 to vector<2x8x128xf32>
    %78 = arith.mulf %77, %76 : vector<2x8x128xf32>
    %79 = math.tanh %78 : vector<2x8x128xf32>
    %cst_27 = arith.constant 5.000000e-01 : f32
    %80 = vector.broadcast %cst_27 : f32 to vector<2x8x128xf32>
    %81 = arith.mulf %80, %79 : vector<2x8x128xf32>
    %cst_28 = arith.constant 5.000000e-01 : f32
    %82 = vector.broadcast %cst_28 : f32 to vector<2x8x128xf32>
    %83 = arith.addf %82, %81 : vector<2x8x128xf32>
    %84 = vector.extract_strided_slice %83 {offsets = [0, 0, 0], sizes = [2, 8, 32], strides = [1, 1, 1]} : vector<2x8x128xf32> to vector<2x8x32xf32>
    %85 = vector.extract_strided_slice %83 {offsets = [0, 0, 32], sizes = [2, 8, 32], strides = [1, 1, 1]} : vector<2x8x128xf32> to vector<2x8x32xf32>
    %86 = vector.extract_strided_slice %83 {offsets = [0, 0, 96], sizes = [2, 8, 32], strides = [1, 1, 1]} : vector<2x8x128xf32> to vector<2x8x32xf32>
    %87 = vector.extract_strided_slice %76 {offsets = [0, 0, 64], sizes = [2, 8, 32], strides = [1, 1, 1]} : vector<2x8x128xf32> to vector<2x8x32xf32>
    %88 = math.tanh %87 : vector<2x8x32xf32>
    %89 = arith.mulf %85, %55 : vector<2x8x32xf32>
    %90 = arith.mulf %84, %88 : vector<2x8x32xf32>
    %91 = arith.addf %89, %90 : vector<2x8x32xf32>
    %92 = math.tanh %91 : vector<2x8x32xf32>
    %93 = arith.mulf %86, %92 : vector<2x8x32xf32>
    %94 = arith.addf %93, %0 : vector<2x8x32xf32>
    %c2_i32 = arith.constant 2 : i32
    %95 = arith.truncf %94 : vector<2x8x32xf32> to vector<2x8x32xbf16>
    "tpu.trace_start"() <{level = 10 : i32, message = "bnd,bfd->bnf"}> : () -> ()
    %cst_29 = arith.constant dense<0.000000e+00> : vector<2x8x136xf32>
    %96 = tpu.matmul %95, %21, %cst_29 {dimension_numbers = #tpu.dot_dimension_numbers<[2], [2], [1], [1], [0, 0, 0, 1, 1, 1], [0], [0]>} : vector<2x8x32xbf16>, vector<2x136x32xbf16>, vector<2x8x136xf32> -> vector<2x8x136xf32>
    "tpu.trace_stop"() : () -> ()
    %97 = vector.extract_strided_slice %96 {offsets = [0, 0, 0], sizes = [2, 8, 128], strides = [1, 1, 1]} : vector<2x8x136xf32> to vector<2x8x128xf32>
    %98 = vector.extract_strided_slice %96 {offsets = [0, 0, 128], sizes = [2, 8, 8], strides = [1, 1, 1]} : vector<2x8x136xf32> to vector<2x8x8xf32>
    %cst_30 = arith.constant dense<0xFF800000> : vector<2x8xf32>
    %99 = vector.multi_reduction <maximumf>, %98, %cst_30 [2] : vector<2x8x8xf32> to vector<2x8xf32>
    %100 = vector.shape_cast %99 : vector<2x8xf32> to vector<2x8x1xf32>
    %101 = vector.broadcast %100 : vector<2x8x1xf32> to vector<2x8x8xf32>
    %102 = arith.subf %98, %101 : vector<2x8x8xf32>
    %103 = math.exp %102 : vector<2x8x8xf32>
    %104 = arith.truncf %103 : vector<2x8x8xf32> to vector<2x8x8xbf16>
    "tpu.trace_start"() <{level = 10 : i32, message = "bnk,bkf->bnf"}> : () -> ()
    %cst_31 = arith.constant dense<0.000000e+00> : vector<2x8x128xf32>
    %105 = tpu.matmul %104, %16, %cst_31 {dimension_numbers = #tpu.dot_dimension_numbers<[2], [1], [1], [2], [0, 0, 0, 1, 1, 2], [0], [0]>} : vector<2x8x8xbf16>, vector<2x8x128xbf16>, vector<2x8x128xf32> -> vector<2x8x128xf32>
    "tpu.trace_stop"() : () -> ()
    %cst_32 = arith.constant dense<0.000000e+00> : vector<2x8xf32>
    %106 = vector.multi_reduction <add>, %103, %cst_32 [2] : vector<2x8x8xf32> to vector<2x8xf32>
    %107 = vector.shape_cast %106 : vector<2x8xf32> to vector<2x8x1xf32>
    %108 = tpu.reciprocal %107 {approx = true} : vector<2x8x1xf32> -> vector<2x8x1xf32>
    %109 = vector.broadcast %108 : vector<2x8x1xf32> to vector<2x8x128xf32>
    %110 = arith.mulf %105, %109 : vector<2x8x128xf32>
    %111 = arith.addf %11, %110 : vector<2x8x128xf32>
    %112 = arith.addf %111, %97 : vector<2x8x128xf32>
    %cst_33 = arith.constant 5.000000e-01 : f32
    %113 = vector.broadcast %cst_33 : f32 to vector<2x8x128xf32>
    %114 = arith.mulf %113, %112 : vector<2x8x128xf32>
    %115 = math.tanh %114 : vector<2x8x128xf32>
    %cst_34 = arith.constant 5.000000e-01 : f32
    %116 = vector.broadcast %cst_34 : f32 to vector<2x8x128xf32>
    %117 = arith.mulf %116, %115 : vector<2x8x128xf32>
    %cst_35 = arith.constant 5.000000e-01 : f32
    %118 = vector.broadcast %cst_35 : f32 to vector<2x8x128xf32>
    %119 = arith.addf %118, %117 : vector<2x8x128xf32>
    %120 = vector.extract_strided_slice %119 {offsets = [0, 0, 0], sizes = [2, 8, 32], strides = [1, 1, 1]} : vector<2x8x128xf32> to vector<2x8x32xf32>
    %121 = vector.extract_strided_slice %119 {offsets = [0, 0, 32], sizes = [2, 8, 32], strides = [1, 1, 1]} : vector<2x8x128xf32> to vector<2x8x32xf32>
    %122 = vector.extract_strided_slice %119 {offsets = [0, 0, 96], sizes = [2, 8, 32], strides = [1, 1, 1]} : vector<2x8x128xf32> to vector<2x8x32xf32>
    %123 = vector.extract_strided_slice %112 {offsets = [0, 0, 64], sizes = [2, 8, 32], strides = [1, 1, 1]} : vector<2x8x128xf32> to vector<2x8x32xf32>
    %124 = math.tanh %123 : vector<2x8x32xf32>
    %125 = arith.mulf %121, %91 : vector<2x8x32xf32>
    %126 = arith.mulf %120, %124 : vector<2x8x32xf32>
    %127 = arith.addf %125, %126 : vector<2x8x32xf32>
    %128 = math.tanh %127 : vector<2x8x32xf32>
    %129 = arith.mulf %122, %128 : vector<2x8x32xf32>
    %130 = arith.addf %129, %0 : vector<2x8x32xf32>
    %c3_i32 = arith.constant 3 : i32
    %131 = arith.truncf %130 : vector<2x8x32xf32> to vector<2x8x32xbf16>
    "tpu.trace_start"() <{level = 10 : i32, message = "bnd,bfd->bnf"}> : () -> ()
    %cst_36 = arith.constant dense<0.000000e+00> : vector<2x8x136xf32>
    %132 = tpu.matmul %131, %21, %cst_36 {dimension_numbers = #tpu.dot_dimension_numbers<[2], [2], [1], [1], [0, 0, 0, 1, 1, 1], [0], [0]>} : vector<2x8x32xbf16>, vector<2x136x32xbf16>, vector<2x8x136xf32> -> vector<2x8x136xf32>
    "tpu.trace_stop"() : () -> ()
    %133 = vector.extract_strided_slice %132 {offsets = [0, 0, 0], sizes = [2, 8, 128], strides = [1, 1, 1]} : vector<2x8x136xf32> to vector<2x8x128xf32>
    %134 = vector.extract_strided_slice %132 {offsets = [0, 0, 128], sizes = [2, 8, 8], strides = [1, 1, 1]} : vector<2x8x136xf32> to vector<2x8x8xf32>
    %cst_37 = arith.constant dense<0xFF800000> : vector<2x8xf32>
    %135 = vector.multi_reduction <maximumf>, %134, %cst_37 [2] : vector<2x8x8xf32> to vector<2x8xf32>
    %136 = vector.shape_cast %135 : vector<2x8xf32> to vector<2x8x1xf32>
    %137 = vector.broadcast %136 : vector<2x8x1xf32> to vector<2x8x8xf32>
    %138 = arith.subf %134, %137 : vector<2x8x8xf32>
    %139 = math.exp %138 : vector<2x8x8xf32>
    %140 = arith.truncf %139 : vector<2x8x8xf32> to vector<2x8x8xbf16>
    "tpu.trace_start"() <{level = 10 : i32, message = "bnk,bkf->bnf"}> : () -> ()
    %cst_38 = arith.constant dense<0.000000e+00> : vector<2x8x128xf32>
    %141 = tpu.matmul %140, %16, %cst_38 {dimension_numbers = #tpu.dot_dimension_numbers<[2], [1], [1], [2], [0, 0, 0, 1, 1, 2], [0], [0]>} : vector<2x8x8xbf16>, vector<2x8x128xbf16>, vector<2x8x128xf32> -> vector<2x8x128xf32>
    "tpu.trace_stop"() : () -> ()
    %cst_39 = arith.constant dense<0.000000e+00> : vector<2x8xf32>
    %142 = vector.multi_reduction <add>, %139, %cst_39 [2] : vector<2x8x8xf32> to vector<2x8xf32>
    %143 = vector.shape_cast %142 : vector<2x8xf32> to vector<2x8x1xf32>
    %144 = tpu.reciprocal %143 {approx = true} : vector<2x8x1xf32> -> vector<2x8x1xf32>
    %145 = vector.broadcast %144 : vector<2x8x1xf32> to vector<2x8x128xf32>
    %146 = arith.mulf %141, %145 : vector<2x8x128xf32>
    %147 = arith.addf %11, %146 : vector<2x8x128xf32>
    %148 = arith.addf %147, %133 : vector<2x8x128xf32>
    %cst_40 = arith.constant 5.000000e-01 : f32
    %149 = vector.broadcast %cst_40 : f32 to vector<2x8x128xf32>
    %150 = arith.mulf %149, %148 : vector<2x8x128xf32>
    %151 = math.tanh %150 : vector<2x8x128xf32>
    %cst_41 = arith.constant 5.000000e-01 : f32
    %152 = vector.broadcast %cst_41 : f32 to vector<2x8x128xf32>
    %153 = arith.mulf %152, %151 : vector<2x8x128xf32>
    %cst_42 = arith.constant 5.000000e-01 : f32
    %154 = vector.broadcast %cst_42 : f32 to vector<2x8x128xf32>
    %155 = arith.addf %154, %153 : vector<2x8x128xf32>
    %156 = vector.extract_strided_slice %155 {offsets = [0, 0, 0], sizes = [2, 8, 32], strides = [1, 1, 1]} : vector<2x8x128xf32> to vector<2x8x32xf32>
    %157 = vector.extract_strided_slice %155 {offsets = [0, 0, 32], sizes = [2, 8, 32], strides = [1, 1, 1]} : vector<2x8x128xf32> to vector<2x8x32xf32>
    %158 = vector.extract_strided_slice %155 {offsets = [0, 0, 96], sizes = [2, 8, 32], strides = [1, 1, 1]} : vector<2x8x128xf32> to vector<2x8x32xf32>
    %159 = vector.extract_strided_slice %148 {offsets = [0, 0, 64], sizes = [2, 8, 32], strides = [1, 1, 1]} : vector<2x8x128xf32> to vector<2x8x32xf32>
    %160 = math.tanh %159 : vector<2x8x32xf32>
    %161 = arith.mulf %157, %127 : vector<2x8x32xf32>
    %162 = arith.mulf %156, %160 : vector<2x8x32xf32>
    %163 = arith.addf %161, %162 : vector<2x8x32xf32>
    %164 = math.tanh %163 : vector<2x8x32xf32>
    %165 = arith.mulf %158, %164 : vector<2x8x32xf32>
    %166 = arith.addf %165, %0 : vector<2x8x32xf32>
    %c4_i32 = arith.constant 4 : i32
    %167 = arith.truncf %166 : vector<2x8x32xf32> to vector<2x8x32xbf16>
    "tpu.trace_start"() <{level = 10 : i32, message = "bnd,bfd->bnf"}> : () -> ()
    %cst_43 = arith.constant dense<0.000000e+00> : vector<2x8x136xf32>
    %168 = tpu.matmul %167, %21, %cst_43 {dimension_numbers = #tpu.dot_dimension_numbers<[2], [2], [1], [1], [0, 0, 0, 1, 1, 1], [0], [0]>} : vector<2x8x32xbf16>, vector<2x136x32xbf16>, vector<2x8x136xf32> -> vector<2x8x136xf32>
    "tpu.trace_stop"() : () -> ()
    %169 = vector.extract_strided_slice %168 {offsets = [0, 0, 0], sizes = [2, 8, 128], strides = [1, 1, 1]} : vector<2x8x136xf32> to vector<2x8x128xf32>
    %170 = vector.extract_strided_slice %168 {offsets = [0, 0, 128], sizes = [2, 8, 8], strides = [1, 1, 1]} : vector<2x8x136xf32> to vector<2x8x8xf32>
    %cst_44 = arith.constant dense<0xFF800000> : vector<2x8xf32>
    %171 = vector.multi_reduction <maximumf>, %170, %cst_44 [2] : vector<2x8x8xf32> to vector<2x8xf32>
    %172 = vector.shape_cast %171 : vector<2x8xf32> to vector<2x8x1xf32>
    %173 = vector.broadcast %172 : vector<2x8x1xf32> to vector<2x8x8xf32>
    %174 = arith.subf %170, %173 : vector<2x8x8xf32>
    %175 = math.exp %174 : vector<2x8x8xf32>
    %176 = arith.truncf %175 : vector<2x8x8xf32> to vector<2x8x8xbf16>
    "tpu.trace_start"() <{level = 10 : i32, message = "bnk,bkf->bnf"}> : () -> ()
    %cst_45 = arith.constant dense<0.000000e+00> : vector<2x8x128xf32>
    %177 = tpu.matmul %176, %16, %cst_45 {dimension_numbers = #tpu.dot_dimension_numbers<[2], [1], [1], [2], [0, 0, 0, 1, 1, 2], [0], [0]>} : vector<2x8x8xbf16>, vector<2x8x128xbf16>, vector<2x8x128xf32> -> vector<2x8x128xf32>
    "tpu.trace_stop"() : () -> ()
    %cst_46 = arith.constant dense<0.000000e+00> : vector<2x8xf32>
    %178 = vector.multi_reduction <add>, %175, %cst_46 [2] : vector<2x8x8xf32> to vector<2x8xf32>
    %179 = vector.shape_cast %178 : vector<2x8xf32> to vector<2x8x1xf32>
    %180 = tpu.reciprocal %179 {approx = true} : vector<2x8x1xf32> -> vector<2x8x1xf32>
    %181 = vector.broadcast %180 : vector<2x8x1xf32> to vector<2x8x128xf32>
    %182 = arith.mulf %177, %181 : vector<2x8x128xf32>
    %183 = arith.addf %11, %182 : vector<2x8x128xf32>
    %184 = arith.addf %183, %169 : vector<2x8x128xf32>
    %cst_47 = arith.constant 5.000000e-01 : f32
    %185 = vector.broadcast %cst_47 : f32 to vector<2x8x128xf32>
    %186 = arith.mulf %185, %184 : vector<2x8x128xf32>
    %187 = math.tanh %186 : vector<2x8x128xf32>
    %cst_48 = arith.constant 5.000000e-01 : f32
    %188 = vector.broadcast %cst_48 : f32 to vector<2x8x128xf32>
    %189 = arith.mulf %188, %187 : vector<2x8x128xf32>
    %cst_49 = arith.constant 5.000000e-01 : f32
    %190 = vector.broadcast %cst_49 : f32 to vector<2x8x128xf32>
    %191 = arith.addf %190, %189 : vector<2x8x128xf32>
    %192 = vector.extract_strided_slice %191 {offsets = [0, 0, 0], sizes = [2, 8, 32], strides = [1, 1, 1]} : vector<2x8x128xf32> to vector<2x8x32xf32>
    %193 = vector.extract_strided_slice %191 {offsets = [0, 0, 32], sizes = [2, 8, 32], strides = [1, 1, 1]} : vector<2x8x128xf32> to vector<2x8x32xf32>
    %194 = vector.extract_strided_slice %191 {offsets = [0, 0, 96], sizes = [2, 8, 32], strides = [1, 1, 1]} : vector<2x8x128xf32> to vector<2x8x32xf32>
    %195 = vector.extract_strided_slice %184 {offsets = [0, 0, 64], sizes = [2, 8, 32], strides = [1, 1, 1]} : vector<2x8x128xf32> to vector<2x8x32xf32>
    %196 = math.tanh %195 : vector<2x8x32xf32>
    %197 = arith.mulf %193, %163 : vector<2x8x32xf32>
    %198 = arith.mulf %192, %196 : vector<2x8x32xf32>
    %199 = arith.addf %197, %198 : vector<2x8x32xf32>
    %200 = math.tanh %199 : vector<2x8x32xf32>
    %201 = arith.mulf %194, %200 : vector<2x8x32xf32>
    %202 = arith.addf %201, %0 : vector<2x8x32xf32>
    %c5_i32 = arith.constant 5 : i32
    %203 = arith.truncf %202 : vector<2x8x32xf32> to vector<2x8x32xbf16>
    "tpu.trace_start"() <{level = 10 : i32, message = "bnd,bfd->bnf"}> : () -> ()
    %cst_50 = arith.constant dense<0.000000e+00> : vector<2x8x136xf32>
    %204 = tpu.matmul %203, %21, %cst_50 {dimension_numbers = #tpu.dot_dimension_numbers<[2], [2], [1], [1], [0, 0, 0, 1, 1, 1], [0], [0]>} : vector<2x8x32xbf16>, vector<2x136x32xbf16>, vector<2x8x136xf32> -> vector<2x8x136xf32>
    "tpu.trace_stop"() : () -> ()
    %205 = vector.extract_strided_slice %204 {offsets = [0, 0, 0], sizes = [2, 8, 128], strides = [1, 1, 1]} : vector<2x8x136xf32> to vector<2x8x128xf32>
    %206 = vector.extract_strided_slice %204 {offsets = [0, 0, 128], sizes = [2, 8, 8], strides = [1, 1, 1]} : vector<2x8x136xf32> to vector<2x8x8xf32>
    %cst_51 = arith.constant dense<0xFF800000> : vector<2x8xf32>
    %207 = vector.multi_reduction <maximumf>, %206, %cst_51 [2] : vector<2x8x8xf32> to vector<2x8xf32>
    %208 = vector.shape_cast %207 : vector<2x8xf32> to vector<2x8x1xf32>
    %209 = vector.broadcast %208 : vector<2x8x1xf32> to vector<2x8x8xf32>
    %210 = arith.subf %206, %209 : vector<2x8x8xf32>
    %211 = math.exp %210 : vector<2x8x8xf32>
    %212 = arith.truncf %211 : vector<2x8x8xf32> to vector<2x8x8xbf16>
    "tpu.trace_start"() <{level = 10 : i32, message = "bnk,bkf->bnf"}> : () -> ()
    %cst_52 = arith.constant dense<0.000000e+00> : vector<2x8x128xf32>
    %213 = tpu.matmul %212, %16, %cst_52 {dimension_numbers = #tpu.dot_dimension_numbers<[2], [1], [1], [2], [0, 0, 0, 1, 1, 2], [0], [0]>} : vector<2x8x8xbf16>, vector<2x8x128xbf16>, vector<2x8x128xf32> -> vector<2x8x128xf32>
    "tpu.trace_stop"() : () -> ()
    %cst_53 = arith.constant dense<0.000000e+00> : vector<2x8xf32>
    %214 = vector.multi_reduction <add>, %211, %cst_53 [2] : vector<2x8x8xf32> to vector<2x8xf32>
    %215 = vector.shape_cast %214 : vector<2x8xf32> to vector<2x8x1xf32>
    %216 = tpu.reciprocal %215 {approx = true} : vector<2x8x1xf32> -> vector<2x8x1xf32>
    %217 = vector.broadcast %216 : vector<2x8x1xf32> to vector<2x8x128xf32>
    %218 = arith.mulf %213, %217 : vector<2x8x128xf32>
    %219 = arith.addf %11, %218 : vector<2x8x128xf32>
    %220 = arith.addf %219, %205 : vector<2x8x128xf32>
    %cst_54 = arith.constant 5.000000e-01 : f32
    %221 = vector.broadcast %cst_54 : f32 to vector<2x8x128xf32>
    %222 = arith.mulf %221, %220 : vector<2x8x128xf32>
    %223 = math.tanh %222 : vector<2x8x128xf32>
    %cst_55 = arith.constant 5.000000e-01 : f32
    %224 = vector.broadcast %cst_55 : f32 to vector<2x8x128xf32>
    %225 = arith.mulf %224, %223 : vector<2x8x128xf32>
    %cst_56 = arith.constant 5.000000e-01 : f32
    %226 = vector.broadcast %cst_56 : f32 to vector<2x8x128xf32>
    %227 = arith.addf %226, %225 : vector<2x8x128xf32>
    %228 = vector.extract_strided_slice %227 {offsets = [0, 0, 0], sizes = [2, 8, 32], strides = [1, 1, 1]} : vector<2x8x128xf32> to vector<2x8x32xf32>
    %229 = vector.extract_strided_slice %227 {offsets = [0, 0, 32], sizes = [2, 8, 32], strides = [1, 1, 1]} : vector<2x8x128xf32> to vector<2x8x32xf32>
    %230 = vector.extract_strided_slice %227 {offsets = [0, 0, 96], sizes = [2, 8, 32], strides = [1, 1, 1]} : vector<2x8x128xf32> to vector<2x8x32xf32>
    %231 = vector.extract_strided_slice %220 {offsets = [0, 0, 64], sizes = [2, 8, 32], strides = [1, 1, 1]} : vector<2x8x128xf32> to vector<2x8x32xf32>
    %232 = math.tanh %231 : vector<2x8x32xf32>
    %233 = arith.mulf %229, %199 : vector<2x8x32xf32>
    %234 = arith.mulf %228, %232 : vector<2x8x32xf32>
    %235 = arith.addf %233, %234 : vector<2x8x32xf32>
    %236 = math.tanh %235 : vector<2x8x32xf32>
    %237 = arith.mulf %230, %236 : vector<2x8x32xf32>
    %238 = arith.addf %237, %0 : vector<2x8x32xf32>
    %c6_i32 = arith.constant 6 : i32
    %239 = arith.truncf %238 : vector<2x8x32xf32> to vector<2x8x32xbf16>
    "tpu.trace_start"() <{level = 10 : i32, message = "bnd,bfd->bnf"}> : () -> ()
    %cst_57 = arith.constant dense<0.000000e+00> : vector<2x8x136xf32>
    %240 = tpu.matmul %239, %21, %cst_57 {dimension_numbers = #tpu.dot_dimension_numbers<[2], [2], [1], [1], [0, 0, 0, 1, 1, 1], [0], [0]>} : vector<2x8x32xbf16>, vector<2x136x32xbf16>, vector<2x8x136xf32> -> vector<2x8x136xf32>
    "tpu.trace_stop"() : () -> ()
    %241 = vector.extract_strided_slice %240 {offsets = [0, 0, 0], sizes = [2, 8, 128], strides = [1, 1, 1]} : vector<2x8x136xf32> to vector<2x8x128xf32>
    %242 = vector.extract_strided_slice %240 {offsets = [0, 0, 128], sizes = [2, 8, 8], strides = [1, 1, 1]} : vector<2x8x136xf32> to vector<2x8x8xf32>
    %cst_58 = arith.constant dense<0xFF800000> : vector<2x8xf32>
    %243 = vector.multi_reduction <maximumf>, %242, %cst_58 [2] : vector<2x8x8xf32> to vector<2x8xf32>
    %244 = vector.shape_cast %243 : vector<2x8xf32> to vector<2x8x1xf32>
    %245 = vector.broadcast %244 : vector<2x8x1xf32> to vector<2x8x8xf32>
    %246 = arith.subf %242, %245 : vector<2x8x8xf32>
    %247 = math.exp %246 : vector<2x8x8xf32>
    %248 = arith.truncf %247 : vector<2x8x8xf32> to vector<2x8x8xbf16>
    "tpu.trace_start"() <{level = 10 : i32, message = "bnk,bkf->bnf"}> : () -> ()
    %cst_59 = arith.constant dense<0.000000e+00> : vector<2x8x128xf32>
    %249 = tpu.matmul %248, %16, %cst_59 {dimension_numbers = #tpu.dot_dimension_numbers<[2], [1], [1], [2], [0, 0, 0, 1, 1, 2], [0], [0]>} : vector<2x8x8xbf16>, vector<2x8x128xbf16>, vector<2x8x128xf32> -> vector<2x8x128xf32>
    "tpu.trace_stop"() : () -> ()
    %cst_60 = arith.constant dense<0.000000e+00> : vector<2x8xf32>
    %250 = vector.multi_reduction <add>, %247, %cst_60 [2] : vector<2x8x8xf32> to vector<2x8xf32>
    %251 = vector.shape_cast %250 : vector<2x8xf32> to vector<2x8x1xf32>
    %252 = tpu.reciprocal %251 {approx = true} : vector<2x8x1xf32> -> vector<2x8x1xf32>
    %253 = vector.broadcast %252 : vector<2x8x1xf32> to vector<2x8x128xf32>
    %254 = arith.mulf %249, %253 : vector<2x8x128xf32>
    %255 = arith.addf %11, %254 : vector<2x8x128xf32>
    %256 = arith.addf %255, %241 : vector<2x8x128xf32>
    %cst_61 = arith.constant 5.000000e-01 : f32
    %257 = vector.broadcast %cst_61 : f32 to vector<2x8x128xf32>
    %258 = arith.mulf %257, %256 : vector<2x8x128xf32>
    %259 = math.tanh %258 : vector<2x8x128xf32>
    %cst_62 = arith.constant 5.000000e-01 : f32
    %260 = vector.broadcast %cst_62 : f32 to vector<2x8x128xf32>
    %261 = arith.mulf %260, %259 : vector<2x8x128xf32>
    %cst_63 = arith.constant 5.000000e-01 : f32
    %262 = vector.broadcast %cst_63 : f32 to vector<2x8x128xf32>
    %263 = arith.addf %262, %261 : vector<2x8x128xf32>
    %264 = vector.extract_strided_slice %263 {offsets = [0, 0, 0], sizes = [2, 8, 32], strides = [1, 1, 1]} : vector<2x8x128xf32> to vector<2x8x32xf32>
    %265 = vector.extract_strided_slice %263 {offsets = [0, 0, 32], sizes = [2, 8, 32], strides = [1, 1, 1]} : vector<2x8x128xf32> to vector<2x8x32xf32>
    %266 = vector.extract_strided_slice %263 {offsets = [0, 0, 96], sizes = [2, 8, 32], strides = [1, 1, 1]} : vector<2x8x128xf32> to vector<2x8x32xf32>
    %267 = vector.extract_strided_slice %256 {offsets = [0, 0, 64], sizes = [2, 8, 32], strides = [1, 1, 1]} : vector<2x8x128xf32> to vector<2x8x32xf32>
    %268 = math.tanh %267 : vector<2x8x32xf32>
    %269 = arith.mulf %265, %235 : vector<2x8x32xf32>
    %270 = arith.mulf %264, %268 : vector<2x8x32xf32>
    %271 = arith.addf %269, %270 : vector<2x8x32xf32>
    %272 = math.tanh %271 : vector<2x8x32xf32>
    %273 = arith.mulf %266, %272 : vector<2x8x32xf32>
    %274 = arith.addf %273, %0 : vector<2x8x32xf32>
    %c7_i32 = arith.constant 7 : i32
    %275 = arith.truncf %274 : vector<2x8x32xf32> to vector<2x8x32xbf16>
    "tpu.trace_start"() <{level = 10 : i32, message = "bnd,bfd->bnf"}> : () -> ()
    %cst_64 = arith.constant dense<0.000000e+00> : vector<2x8x136xf32>
    %276 = tpu.matmul %275, %21, %cst_64 {dimension_numbers = #tpu.dot_dimension_numbers<[2], [2], [1], [1], [0, 0, 0, 1, 1, 1], [0], [0]>} : vector<2x8x32xbf16>, vector<2x136x32xbf16>, vector<2x8x136xf32> -> vector<2x8x136xf32>
    "tpu.trace_stop"() : () -> ()
    %277 = vector.extract_strided_slice %276 {offsets = [0, 0, 0], sizes = [2, 8, 128], strides = [1, 1, 1]} : vector<2x8x136xf32> to vector<2x8x128xf32>
    %278 = vector.extract_strided_slice %276 {offsets = [0, 0, 128], sizes = [2, 8, 8], strides = [1, 1, 1]} : vector<2x8x136xf32> to vector<2x8x8xf32>
    %cst_65 = arith.constant dense<0xFF800000> : vector<2x8xf32>
    %279 = vector.multi_reduction <maximumf>, %278, %cst_65 [2] : vector<2x8x8xf32> to vector<2x8xf32>
    %280 = vector.shape_cast %279 : vector<2x8xf32> to vector<2x8x1xf32>
    %281 = vector.broadcast %280 : vector<2x8x1xf32> to vector<2x8x8xf32>
    %282 = arith.subf %278, %281 : vector<2x8x8xf32>
    %283 = math.exp %282 : vector<2x8x8xf32>
    %284 = arith.truncf %283 : vector<2x8x8xf32> to vector<2x8x8xbf16>
    "tpu.trace_start"() <{level = 10 : i32, message = "bnk,bkf->bnf"}> : () -> ()
    %cst_66 = arith.constant dense<0.000000e+00> : vector<2x8x128xf32>
    %285 = tpu.matmul %284, %16, %cst_66 {dimension_numbers = #tpu.dot_dimension_numbers<[2], [1], [1], [2], [0, 0, 0, 1, 1, 2], [0], [0]>} : vector<2x8x8xbf16>, vector<2x8x128xbf16>, vector<2x8x128xf32> -> vector<2x8x128xf32>
    "tpu.trace_stop"() : () -> ()
    %cst_67 = arith.constant dense<0.000000e+00> : vector<2x8xf32>
    %286 = vector.multi_reduction <add>, %283, %cst_67 [2] : vector<2x8x8xf32> to vector<2x8xf32>
    %287 = vector.shape_cast %286 : vector<2x8xf32> to vector<2x8x1xf32>
    %288 = tpu.reciprocal %287 {approx = true} : vector<2x8x1xf32> -> vector<2x8x1xf32>
    %289 = vector.broadcast %288 : vector<2x8x1xf32> to vector<2x8x128xf32>
    %290 = arith.mulf %285, %289 : vector<2x8x128xf32>
    %291 = arith.addf %11, %290 : vector<2x8x128xf32>
    %292 = arith.addf %291, %277 : vector<2x8x128xf32>
    %cst_68 = arith.constant 5.000000e-01 : f32
    %293 = vector.broadcast %cst_68 : f32 to vector<2x8x128xf32>
    %294 = arith.mulf %293, %292 : vector<2x8x128xf32>
    %295 = math.tanh %294 : vector<2x8x128xf32>
    %cst_69 = arith.constant 5.000000e-01 : f32
    %296 = vector.broadcast %cst_69 : f32 to vector<2x8x128xf32>
    %297 = arith.mulf %296, %295 : vector<2x8x128xf32>
    %cst_70 = arith.constant 5.000000e-01 : f32
    %298 = vector.broadcast %cst_70 : f32 to vector<2x8x128xf32>
    %299 = arith.addf %298, %297 : vector<2x8x128xf32>
    %300 = vector.extract_strided_slice %299 {offsets = [0, 0, 0], sizes = [2, 8, 32], strides = [1, 1, 1]} : vector<2x8x128xf32> to vector<2x8x32xf32>
    %301 = vector.extract_strided_slice %299 {offsets = [0, 0, 32], sizes = [2, 8, 32], strides = [1, 1, 1]} : vector<2x8x128xf32> to vector<2x8x32xf32>
    %302 = vector.extract_strided_slice %299 {offsets = [0, 0, 96], sizes = [2, 8, 32], strides = [1, 1, 1]} : vector<2x8x128xf32> to vector<2x8x32xf32>
    %303 = vector.extract_strided_slice %292 {offsets = [0, 0, 64], sizes = [2, 8, 32], strides = [1, 1, 1]} : vector<2x8x128xf32> to vector<2x8x32xf32>
    %304 = math.tanh %303 : vector<2x8x32xf32>
    %305 = arith.mulf %301, %271 : vector<2x8x32xf32>
    %306 = arith.mulf %300, %304 : vector<2x8x32xf32>
    %307 = arith.addf %305, %306 : vector<2x8x32xf32>
    %308 = math.tanh %307 : vector<2x8x32xf32>
    %309 = arith.mulf %302, %308 : vector<2x8x32xf32>
    %310 = arith.addf %309, %0 : vector<2x8x32xf32>
    %c0_71 = arith.constant 0 : index
    %c0_72 = arith.constant 0 : index
    %c0_73 = arith.constant 0 : index
    %311 = vector.load %arg7[%c0_71, %c0_72, %c0_73] : memref<2x8x32xf32, #tpu.memory_space<vmem>>, vector<2x8x32xf32>
    tpu.vector_store %arg7[%c0_71, %c0_72, %c0_73], %310 {strides = array<i32>} : memref<2x8x32xf32, #tpu.memory_space<vmem>>, vector<2x8x32xf32>,
    return
  }
  func.func @transform_0(%arg0: i32) -> (i32, i32, i32) {
    %c0_i32 = arith.constant 0 : i32
    %c0_i32_0 = arith.constant 0 : i32
    %c0_i32_1 = arith.constant 0 : i32
    return %arg0, %c0_i32, %c0_i32_0 : i32, i32, i32
  }
  func.func @transform_1(%arg0: i32) -> (i32, i32, i32) {
    %c0_i32 = arith.constant 0 : i32
    %c0_i32_0 = arith.constant 0 : i32
    %c0_i32_1 = arith.constant 0 : i32
    return %arg0, %c0_i32, %c0_i32_0 : i32, i32, i32
  }
  func.func @transform_2(%arg0: i32) -> (i32, i32) {
    %c0_i32 = arith.constant 0 : i32
    %c0_i32_0 = arith.constant 0 : i32
    %c0_i32_1 = arith.constant 0 : i32
    return %c0_i32, %c0_i32_0 : i32, i32
  }
  func.func @transform_3(%arg0: i32) -> (i32, i32) {
    %c0_i32 = arith.constant 0 : i32
    %c0_i32_0 = arith.constant 0 : i32
    %c0_i32_1 = arith.constant 0 : i32
    return %c0_i32, %c0_i32_0 : i32, i32
  }
  func.func @transform_4(%arg0: i32) -> (i32, i32) {
    %c0_i32 = arith.constant 0 : i32
    %c0_i32_0 = arith.constant 0 : i32
    %c0_i32_1 = arith.constant 0 : i32
    return %c0_i32, %c0_i32_0 : i32, i32
  }
  func.func @transform_5(%arg0: i32) -> (i32, i32) {
    %c0_i32 = arith.constant 0 : i32
    %c0_i32_0 = arith.constant 0 : i32
    %c0_i32_1 = arith.constant 0 : i32
    return %c0_i32, %c0_i32_0 : i32, i32
  }
  func.func @transform_6(%arg0: i32) -> (i32, i32, i32) {
    %c0_i32 = arith.constant 0 : i32
    %c0_i32_0 = arith.constant 0 : i32
    %c0_i32_1 = arith.constant 0 : i32
    return %arg0, %c0_i32, %c0_i32_0 : i32, i32, i32
  }
}

</mosaic_0001>

<llo_original>
// kernel: tpu_custom_call.1
$region0: #{tpu_custom_call.1}
  #allocation0 [shape = 'u32[]', space=smem, size = 0x4, offset = 0x4, fixed_abs, tag = 'smem constant byte address 0x4 - core index']
  #allocation1 [shape = 'u32[72,128]{1,0:T(1,128)}', space=vmem, size = 0x9000, scoped, tag = 'internal scratch']
  %s0 = inlined_call_operand.vmem [shape: f32[4,8,32], index: 0, kind: input, shape index: {}]
  %s1 = inlined_call_operand.vmem [shape: f32[4,8,32], index: 1, kind: input, shape index: {}]
  %s2 = inlined_call_operand.vmem [shape: bf16[32,128], index: 2, kind: input, shape index: {}]
  %s3 = inlined_call_operand.hbm [shape: bf16[32,128], index: 3, kind: input, shape index: {}]
  %s4 = inlined_call_operand.vmem [shape: bf16[128,32], index: 4, kind: input, shape index: {}]
  %s5 = inlined_call_operand.vmem [shape: f32[1,128], index: 5, kind: input, shape index: {}]
  %s6 = inlined_call_operand.hbm [shape: f32[4,8,32], index: 6, kind: output, shape index: {}]
  %s7 = sld [smem:[#allocation0]]
  $region61: #{tpu_custom_call.1} parent=0
    _
  %s9 = ssub.s32 1, %s7
  %s10 = scalar_select 0, %s9, %s7
  $region1: #{tpu_custom_call.1} parent=0
    #allocation2 [shape = 'u8[8192]{0}', space=vmem, size = 0x2000, scoped, tag = 'input window, operand 3, single buffered']
    #allocation3 [shape = 's32[2]{0}', space=sflag, size = 0x8, scoped, tag = 'scoped memory for tpu_custom_call.1']
    #allocation4 [shape = 's32[2]{0}', space=sflag, size = 0x8, scoped, tag = 'scoped memory for tpu_custom_call.1']
    #allocation5 [shape = 'u8[16384]{0}', space=vmem, size = 0x4000, scoped, tag = 'output window, operand 0']
    %11 = vsyncpa [#allocation3], 0
    %12 = vsyncpa [#allocation4], 0
    %s13 = scalar_lea.sflag [#allocation4], 1
    %14 = vsyncpa %s13, 0
    loop: start=0, step=1, limit=4
    $region2: #{tpu_custom_call.1} parent=1 // loop_pre_header
      _
    $region3: #{tpu_custom_call.1} parent=1 // loop_header
      %s16 = sphi 0, %s20
      %p17 = scmp.ge.s32.totalorder %s16, 4
      %s26 = sphi 0, %s28
      %s29 = sphi 0, %s26
      %s30 = sphi 0, %s29
      %s46 = sphi 0, %s30
      %s52 = sphi 0, %s54
      %s55 = sphi 0, %s52
      %s56 = sphi 0, %s55
      %s72 = sphi 0, %s56
      %s76 = sphi 0, %s76
      %s78 = sphi 0, %s76
      %s79 = sphi 0, %s78
      %s93 = sphi 0, %s79
      %s97 = sphi 0, %s97
      %s99 = sphi 0, %s97
      %s100 = sphi 0, %s99
      %s114 = sphi 0, %s100
      %s118 = sphi 0, %s118
      %s120 = sphi 0, %s118
      %s121 = sphi 0, %s120
      %s135 = sphi 0, %s121
      %s139 = sphi 0, %s139
      %s141 = sphi 0, %s139
      %s142 = sphi 0, %s141
      %s156 = sphi 0, %s142
      %s162 = sphi 0, %s164
      %s165 = sphi 0, %s162
      %s166 = sphi 0, %s165
      %s182 = sphi 0, %s166
    $region4: #{tpu_custom_call.1} parent=1 // loop_header_branch
      %19 = sbr.rel (%p17) target = $region8
    $region5: #{tpu_custom_call.1} parent=1 // loop_body
      %s21 = ssub.s32 %s16, 1
      %s22 = ssub.s32 %s16, 2
      %s23 = sadd.s32 %s16, 1
      %s24 = ssub.s32 %s16, %s23
      %p25 = scmp.eq.s32.totalorder %s24, 0
      %s27 = sadd.s32 %s26, 1
      %s28 = scalar_select %p25, %s26, %s27
      %p31 = pneg %p25
      %p32 = scmp.eq.s32.totalorder %s16, 1
      %p33 = por %p31, %p32
      %p34 = scmp.ne.s32.totalorder %s26, %s29
      %p35 = scmp.eq.s32.totalorder %s16, 0
      %p36 = por %p34, %p35
      %p37 = scmp.ne.s32.totalorder %s26, %s29
      %p38 = scmp.eq.s32.totalorder %s21, 1
      %p39 = por %p37, %p38
      %p40 = scmp.ne.s32.totalorder %s29, %s30
      %p41 = scmp.eq.s32.totalorder %s21, 0
      %p42 = por %p40, %p41
      %p43 = scmp.ne.s32.totalorder %s29, %s30
      %p44 = scmp.eq.s32.totalorder %s22, 1
      %p45 = por %p43, %p44
      %p47 = scmp.ne.s32.totalorder %s30, %s46
      %p48 = scmp.eq.s32.totalorder %s22, 0
      %p49 = por %p47, %p48
      %s50 = ssub.s32 %s16, %s23
      %p51 = scmp.eq.s32.totalorder %s50, 0
      %s53 = sadd.s32 %s52, 1
      %s54 = scalar_select %p51, %s52, %s53
      %p57 = pneg %p51
      %p58 = scmp.eq.s32.totalorder %s16, 1
      %p59 = por %p57, %p58
      %p60 = scmp.ne.s32.totalorder %s52, %s55
      %p61 = scmp.eq.s32.totalorder %s16, 0
      %p62 = por %p60, %p61
      %p63 = scmp.ne.s32.totalorder %s52, %s55
      %p64 = scmp.eq.s32.totalorder %s21, 1
      %p65 = por %p63, %p64
      %p66 = scmp.ne.s32.totalorder %s55, %s56
      %p67 = scmp.eq.s32.totalorder %s21, 0
      %p68 = por %p66, %p67
      %p69 = scmp.ne.s32.totalorder %s55, %s56
      %p70 = scmp.eq.s32.totalorder %s22, 1
      %p71 = por %p69, %p70
      %p73 = scmp.ne.s32.totalorder %s56, %s72
      %p74 = scmp.eq.s32.totalorder %s22, 0
      %p75 = por %p73, %p74
      %s77 = sadd.s32 %s76, 1
      %p80 = scmp.eq.s32.totalorder %s16, 1
      %p81 = scmp.ne.s32.totalorder %s76, %s78
      %p82 = scmp.eq.s32.totalorder %s16, 0
      %p83 = por %p81, %p82
      %p84 = scmp.ne.s32.totalorder %s76, %s78
      %p85 = scmp.eq.s32.totalorder %s21, 1
      %p86 = por %p84, %p85
      %p87 = scmp.ne.s32.totalorder %s78, %s79
      %p88 = scmp.eq.s32.totalorder %s21, 0
      %p89 = por %p87, %p88
      %p90 = scmp.ne.s32.totalorder %s78, %s79
      %p91 = scmp.eq.s32.totalorder %s22, 1
      %p92 = por %p90, %p91
      %p94 = scmp.ne.s32.totalorder %s79, %s93
      %p95 = scmp.eq.s32.totalorder %s22, 0
      %p96 = por %p94, %p95
      %s98 = sadd.s32 %s97, 1
      %p101 = scmp.eq.s32.totalorder %s16, 1
      %p102 = scmp.ne.s32.totalorder %s97, %s99
      %p103 = scmp.eq.s32.totalorder %s16, 0
      %p104 = por %p102, %p103
      %p105 = scmp.ne.s32.totalorder %s97, %s99
      %p106 = scmp.eq.s32.totalorder %s21, 1
      %p107 = por %p105, %p106
      %p108 = scmp.ne.s32.totalorder %s99, %s100
      %p109 = scmp.eq.s32.totalorder %s21, 0
      %p110 = por %p108, %p109
      %p111 = scmp.ne.s32.totalorder %s99, %s100
      %p112 = scmp.eq.s32.totalorder %s22, 1
      %p113 = por %p111, %p112
      %p115 = scmp.ne.s32.totalorder %s100, %s114
      %p116 = scmp.eq.s32.totalorder %s22, 0
      %p117 = por %p115, %p116
      %s119 = sadd.s32 %s118, 1
      %p122 = scmp.eq.s32.totalorder %s16, 1
      %p123 = scmp.ne.s32.totalorder %s118, %s120
      %p124 = scmp.eq.s32.totalorder %s16, 0
      %p125 = por %p123, %p124
      %p126 = scmp.ne.s32.totalorder %s118, %s120
      %p127 = scmp.eq.s32.totalorder %s21, 1
      %p128 = por %p126, %p127
      %p129 = scmp.ne.s32.totalorder %s120, %s121
      %p130 = scmp.eq.s32.totalorder %s21, 0
      %p131 = por %p129, %p130
      %p132 = scmp.ne.s32.totalorder %s120, %s121
      %p133 = scmp.eq.s32.totalorder %s22, 1
      %p134 = por %p132, %p133
      %p136 = scmp.ne.s32.totalorder %s121, %s135
      %p137 = scmp.eq.s32.totalorder %s22, 0
      %p138 = por %p136, %p137
      %s140 = sadd.s32 %s139, 1
      %p143 = scmp.eq.s32.totalorder %s16, 1
      %p144 = scmp.ne.s32.totalorder %s139, %s141
      %p145 = scmp.eq.s32.totalorder %s16, 0
      %p146 = por %p144, %p145
      %p147 = scmp.ne.s32.totalorder %s139, %s141
      %p148 = scmp.eq.s32.totalorder %s21, 1
      %p149 = por %p147, %p148
      %p150 = scmp.ne.s32.totalorder %s141, %s142
      %p151 = scmp.eq.s32.totalorder %s21, 0
      %p152 = por %p150, %p151
      %p153 = scmp.ne.s32.totalorder %s141, %s142
      %p154 = scmp.eq.s32.totalorder %s22, 1
      %p155 = por %p153, %p154
      %p157 = scmp.ne.s32.totalorder %s142, %s156
      %p158 = scmp.eq.s32.totalorder %s22, 0
      %p159 = por %p157, %p158
      %s160 = ssub.s32 %s16, %s23
      %p161 = scmp.eq.s32.totalorder %s160, 0
      %s163 = sadd.s32 %s162, 1
      %s164 = scalar_select %p161, %s162, %s163
      %p167 = pneg %p161
      %p168 = scmp.eq.s32.totalorder %s16, 1
      %p169 = por %p167, %p168
      %p170 = scmp.ne.s32.totalorder %s162, %s165
      %p171 = scmp.eq.s32.totalorder %s16, 0
      %p172 = por %p170, %p171
      %p173 = scmp.ne.s32.totalorder %s162, %s165
      %p174 = scmp.eq.s32.totalorder %s21, 1
      %p175 = por %p173, %p174
      %p176 = scmp.ne.s32.totalorder %s165, %s166
      %p177 = scmp.eq.s32.totalorder %s21, 0
      %p178 = por %p176, %p177
      %p179 = scmp.ne.s32.totalorder %s165, %s166
      %p180 = scmp.eq.s32.totalorder %s22, 1
      %p181 = por %p179, %p180
      %p183 = scmp.ne.s32.totalorder %s166, %s182
      %p184 = scmp.eq.s32.totalorder %s22, 0
      %p185 = por %p183, %p184
      %p186 = scmp.le.s32.totalorder 1, %s16
      %p187 = scmp.lt.s32.totalorder %s16, 3
      %p188 = pnand %p186, %p187
      %p189 = pneg %p188
      // Predicated region
      $region9: #{tpu_custom_call.1} parent=5 // pred_check
        _
      $region10: #{tpu_custom_call.1} parent=5 // pred_check_branch
        %191 = sbr.rel (%p188) target = $region12
      $region11: #{tpu_custom_call.1} parent=5 // pred_region
        %s192 = ssub.s32 %s16, 1
        // Predicated region
        $region13: #{tpu_custom_call.1} parent=11 // pred_check
          %p193 = pneg %p89
        $region14: #{tpu_custom_call.1} parent=11 // pred_check_branch
          %195 = sbr.rel (%p193) target = $region16
        $region15: #{tpu_custom_call.1} parent=11 // pred_region
          _
        $region16: #{tpu_custom_call.1} parent=11 // pred_fallthru
          _
        // Predicated region
        $region17: #{tpu_custom_call.1} parent=11 // pred_check
          %p196 = pneg %p110
        $region18: #{tpu_custom_call.1} parent=11 // pred_check_branch
          %198 = sbr.rel (%p196) target = $region20
        $region19: #{tpu_custom_call.1} parent=11 // pred_region
          %200 = vsyncadd [#allocation3], 0
          %s201 = sshll.u32 %s3, 4
          %s202 = int_to_ptr.hbm [resolvable:$true] %s201
          %s203 = sshll.u32 [#allocation2], 4
          %s204 = int_to_ptr.vmem [resolvable:$true] %s203
          %209 = dma.hbm_to_vmem [thread:$0]  %s202, 256, %s204, [#allocation3], 64, 64, 4
        $region20: #{tpu_custom_call.1} parent=11 // pred_fallthru
          _
        // Predicated region
        $region21: #{tpu_custom_call.1} parent=11 // pred_check
          %p210 = pneg %p131
        $region22: #{tpu_custom_call.1} parent=11 // pred_check_branch
          %212 = sbr.rel (%p210) target = $region24
        $region23: #{tpu_custom_call.1} parent=11 // pred_region
          _
        $region24: #{tpu_custom_call.1} parent=11 // pred_fallthru
          _
        // Predicated region
        $region25: #{tpu_custom_call.1} parent=11 // pred_check
          %p213 = pneg %p152
        $region26: #{tpu_custom_call.1} parent=11 // pred_check_branch
          %215 = sbr.rel (%p213) target = $region28
        $region27: #{tpu_custom_call.1} parent=11 // pred_region
          _
        $region28: #{tpu_custom_call.1} parent=11 // pred_fallthru
          _
      $region12: #{tpu_custom_call.1} parent=5 // pred_fallthru
        _
      %p216 = scmp.lt.s32.totalorder %s16, 2
      // Predicated region
      $region29: #{tpu_custom_call.1} parent=5 // pred_check
        %p217 = pneg %p216
      $region30: #{tpu_custom_call.1} parent=5 // pred_check_branch
        %219 = sbr.rel (%p217) target = $region32
      $region31: #{tpu_custom_call.1} parent=5 // pred_region
        // Predicated region
        $region33: #{tpu_custom_call.1} parent=31 // pred_check
          %p220 = pneg %p36
        $region34: #{tpu_custom_call.1} parent=31 // pred_check_branch
          %222 = sbr.rel (%p220) target = $region36
        $region35: #{tpu_custom_call.1} parent=31 // pred_region
          %s223 = smul.u32 2, %s16
          %p224 = scmp.lt.s32.totalorder %s223, 3
          %s225 = scalar_select %p224, %s223, 3
          %s226 = smul.addr %s225, 8
          %s227 = scalar_lea.vmem %s0, %s226
          %s228 = smul.u32 2, %s16
        $region36: #{tpu_custom_call.1} parent=31 // pred_fallthru
          _
        // Predicated region
        $region37: #{tpu_custom_call.1} parent=31 // pred_check
          %p229 = pneg %p62
        $region38: #{tpu_custom_call.1} parent=31 // pred_check_branch
          %231 = sbr.rel (%p229) target = $region40
        $region39: #{tpu_custom_call.1} parent=31 // pred_region
          %s232 = smul.u32 2, %s16
          %p233 = scmp.lt.s32.totalorder %s232, 3
          %s234 = scalar_select %p233, %s232, 3
          %s235 = smul.addr %s234, 8
          %s236 = scalar_lea.vmem %s1, %s235
          %s237 = smul.u32 2, %s16
        $region40: #{tpu_custom_call.1} parent=31 // pred_fallthru
          _
      $region32: #{tpu_custom_call.1} parent=5 // pred_fallthru
        _
      %p238 = scmp.le.s32.totalorder 1, %s16
      %p239 = scmp.lt.s32.totalorder %s16, 3
      %p240 = pnand %p238, %p239
      %p241 = pneg %p240
      // Predicated region
      $region41: #{tpu_custom_call.1} parent=5 // pred_check
        _
      $region42: #{tpu_custom_call.1} parent=5 // pred_check_branch
        %243 = sbr.rel (%p240) target = $region44
      $region43: #{tpu_custom_call.1} parent=5 // pred_region
        %s244 = ssub.s32 %s16, 1
        // Predicated region
        $region45: #{tpu_custom_call.1} parent=43 // pred_check
          %p245 = pneg %p110
        $region46: #{tpu_custom_call.1} parent=43 // pred_check_branch
          %247 = sbr.rel (%p245) target = $region48
        $region47: #{tpu_custom_call.1} parent=43 // pred_region
          %249 = dma.done [#allocation3], 256
        $region48: #{tpu_custom_call.1} parent=43 // pred_fallthru
          _
        %s250 = smul.u32 2, %s21
        %p251 = scmp.lt.s32.totalorder %s250, 3
        %s252 = scalar_select %p251, %s250, 3
        %s253 = smul.addr %s252, 8
        %s254 = scalar_lea.vmem %s0, %s253
        %p255 = pneg %p42
        %p256 = pneg %p39
        %s257 = smul.u32 2, %s21
        %p258 = scmp.lt.s32.totalorder %s257, 3
        %s259 = scalar_select %p258, %s257, 3
        %s260 = smul.addr %s259, 8
        %s261 = scalar_lea.vmem %s1, %s260
        %p262 = pneg %p68
        %p263 = pneg %p65
        %p264 = pneg %p89
        %p265 = pneg %p86
        %p266 = pneg %p110
        %p267 = pneg %p107
        %p268 = pneg %p131
        %p269 = pneg %p128
        %p270 = pneg %p152
        %p271 = pneg %p149
        %p272 = pneg %p178
        %p273 = pneg %p175
        %s274 = sand.u32 %s165, 1
        %s275 = scalar_lea.sflag [#allocation4], %s274
        %s276 = sand.u32 %s165, 1
        %s277 = smul.addr %s276, 16
        %s278 = scalar_lea.vmem [#allocation5], %s277
        %s279 = smul.u32 2, %s21
        %p280 = scmp.lt.s32.totalorder %s279, 3
        %s281 = scalar_select %p280, %s279, 3
        %s282 = smul.addr %s281, 8
        %s283 = scalar_lea.vmem %s0, %s282
        %s284 = smul.u32 2, %s21
        %s285 = smul.u32 2, %s21
        %p286 = scmp.lt.s32.totalorder %s285, 3
        %s287 = scalar_select %p286, %s285, 3
        %s288 = smul.addr %s287, 8
        %s289 = scalar_lea.vmem %s1, %s288
        %s290 = smul.u32 2, %s21
        %s291 = smul.u32 2, %s21
        %v293 = vld [vmem:[%s283] sm:$0xff]
        %v294 = vld [vmem:[%s283 + $0x8] sm:$0xff]
        %v295 = vld [vmem:[%s289] sm:$0xff]
        %v296 = vld [vmem:[%s289 + $0x8] sm:$0xff]
        %v297 = vld [vmem:[%s2] sm:$0xf]
        %v298 = vld [vmem:[%s2 + $0x4] sm:$0xf]
        %v299 = vld [vmem:[%s2 + $0x8] sm:$0xf]
        %v300 = vld [vmem:[%s2 + $0xc] sm:$0xf]
        %v301 = vld [vmem:[#allocation2] sm:$0xf]
        %v302 = vld [vmem:[#allocation2 + $0x4] sm:$0xf]
        %v303 = vld [vmem:[#allocation2 + $0x8] sm:$0xf]
        %v304 = vld [vmem:[#allocation2 + $0xc] sm:$0xf]
        %v305 = vld [vmem:[%s4] sm:$0xf]
        %v306 = vld [vmem:[%s4 + $0x4] sm:$0xf]
        %v307 = vld [vmem:[%s4 + $0x8] sm:$0xf]
        %v308 = vld [vmem:[%s4 + $0xc] sm:$0xf]
        %v309 = vld [vmem:[%s4 + $0x10] sm:$0xf]
        %v310 = vld [vmem:[%s4 + $0x14] sm:$0xf]
        %v311 = vld [vmem:[%s4 + $0x18] sm:$0xf]
        %v312 = vld [vmem:[%s4 + $0x1c] sm:$0xf]
        %v313 = vld [vmem:[%s4 + $0x20] sm:$0xf]
        %v314 = vld [vmem:[%s4 + $0x24] sm:$0xf]
        %v315 = vld [vmem:[%s4 + $0x28] sm:$0xf]
        %v316 = vld [vmem:[%s4 + $0x2c] sm:$0xf]
        %v317 = vld [vmem:[%s4 + $0x30] sm:$0xf]
        %v318 = vld [vmem:[%s4 + $0x34] sm:$0xf]
        %v319 = vld [vmem:[%s4 + $0x38] sm:$0xf]
        %v320 = vld [vmem:[%s4 + $0x3c] sm:$0xf]
        %v321 = vld [vmem:[%s5] sm:$0x1]
        %v322 = vpack.c.bf16 %v294, %v293
        %v324 = vperm.slane %v321, 0
        %v330 = vunpack.c.l.b16 %v297
        %v331 = vunpack.c.l.b16 %v298
        %v332 = vunpack.c.l.b16 %v299
        %v333 = vunpack.c.l.b16 %v300
        %v334 = vpack.c.b16 %v331, %v330
        %v335 = vpack.c.b16 %v333, %v332
        %vm338 = vcmask 261120
        %v340 = vsel %vm338, %v322, 0
        %342 = vmatpush.bf16.msra.mxu0 0
        %343 = vmatpush.bf16.msra.mxu0 0
        %344 = vmatpush.bf16.msra.mxu0 0
        %345 = vmatpush.bf16.msra.mxu0 0
        %346 = vmatpush.bf16.msra.mxu0 0
        %347 = vmatpush.bf16.msra.mxu0 0
        %348 = vmatpush.bf16.msra.mxu0 %v335
        %349 = vmatpush.bf16.msra.mxu0 %v334
        %350 = vmatmul.bf16.gmra.mxu0 %v340
        %v351 = vpop.f32.mrf.mxu0
        %v352 = vadd.f32 %v324, %v351
        %v353 = vpop.f32.mrf.mxu0
        %v354 = vadd.f32 %v324, %v353
        %355 = vdwg.mxu0
        %v356 = vpack.c.bf16 %v296, %v295
        %v361 = vunpack.c.l.b16 %v301
        %v362 = vunpack.c.l.b16 %v302
        %v363 = vunpack.c.l.b16 %v303
        %v364 = vunpack.c.l.b16 %v304
        %v365 = vpack.c.b16 %v362, %v361
        %v366 = vpack.c.b16 %v364, %v363
        %v370 = vsel %vm338, %v356, 0
        %372 = vmatpush.bf16.msra.mxu0 0
        %373 = vmatpush.bf16.msra.mxu0 0
        %374 = vmatpush.bf16.msra.mxu0 0
        %375 = vmatpush.bf16.msra.mxu0 0
        %376 = vmatpush.bf16.msra.mxu0 0
        %377 = vmatpush.bf16.msra.mxu0 0
        %378 = vmatpush.bf16.msra.mxu0 %v366
        %379 = vmatpush.bf16.msra.mxu0 %v365
        %380 = vmatmul.bf16.gmra.mxu0 %v370
        %v381 = vpop.f32.mrf.mxu0
        %v382 = vadd.f32 0.0, %v381
        %v383 = vpop.f32.mrf.mxu0
        %v384 = vadd.f32 0.0, %v383
        %385 = vdwg.mxu0
        %v386 = vpack.c.bf16 %v382, %v382
        %v387 = vpack.c.bf16 %v384, %v384
        %v388 = vpack.c.bf16 %v295, %v295
        %v389 = vpack.c.bf16 %v296, %v296
        %v406 = vunpack.c.l.b16 %v305
        %v407 = vunpack.c.l.b16 %v306
        %v408 = vunpack.c.l.b16 %v307
        %v409 = vunpack.c.l.b16 %v308
        %v410 = vunpack.c.l.b16 %v309
        %v411 = vunpack.c.l.b16 %v310
        %v412 = vunpack.c.l.b16 %v311
        %v413 = vunpack.c.l.b16 %v312
        %v414 = vunpack.c.l.b16 %v313
        %v415 = vunpack.c.l.b16 %v314
        %v416 = vunpack.c.l.b16 %v315
        %v417 = vunpack.c.l.b16 %v316
        %v418 = vunpack.c.l.b16 %v317
        %v419 = vunpack.c.l.b16 %v318
        %v420 = vunpack.c.l.b16 %v319
        %v421 = vunpack.c.l.b16 %v320
        %v422 = vpack.c.b16 %v407, %v406
        %v423 = vpack.c.b16 %v409, %v408
        %v424 = vpack.c.b16 %v411, %v410
        %v425 = vpack.c.b16 %v413, %v412
        %v426 = vpack.c.b16 %v415, %v414
        %v427 = vpack.c.b16 %v417, %v416
        %v428 = vpack.c.b16 %v419, %v418
        %v429 = vpack.c.b16 %v421, %v420
        %v430 = vpack.c.bf16 %v293, %v293
        %v431 = vpack.c.bf16 %v294, %v294
        %v433 = vsel %vm338, %v430, 0
        %v436 = vsel %vm338, %v422, 0
        %v439 = vsel %vm338, %v423, 0
        %v442 = vsel %vm338, %v424, 0
        %v445 = vsel %vm338, %v425, 0
        %v448 = vsel %vm338, %v426, 0
        %v451 = vsel %vm338, %v427, 0
        %v454 = vsel %vm338, %v428, 0
        %v457 = vsel %vm338, %v429, 0
        %v460 = vsel %vm338, %v388, 0
        %462 = vmatpush.bf16.xpose.msra.mxu0 %v457
        %463 = vmatpush.bf16.xpose.msra.mxu0 %v454
        %464 = vmatpush.bf16.xpose.msra.mxu0 %v451
        %465 = vmatpush.bf16.xpose.msra.mxu0 %v448
        %466 = vmatpush.bf16.xpose.msra.mxu0 %v445
        %467 = vmatpush.bf16.xpose.msra.mxu0 %v442
        %468 = vmatpush.bf16.xpose.msra.mxu0 %v439
        %469 = vmatpush.bf16.xpose.msra.mxu0 %v436
        %470 = vmatmul.bf16.gmra.mxu0 %v433
        %v471 = vpop.f32.mrf.mxu0
        %v472 = vadd.f32 0.0, %v471
        %v473 = vpop.f32.mrf.mxu0
        %474 = vdwg.mxu0
        %475 = vmatpush.bf16.xpose.msra.mxu0 0
        %476 = vmatpush.bf16.xpose.msra.mxu0 0
        %477 = vmatpush.bf16.xpose.msra.mxu0 0
        %478 = vmatpush.bf16.xpose.msra.mxu0 0
        %479 = vmatpush.bf16.xpose.msra.mxu0 0
        %480 = vmatpush.bf16.xpose.msra.mxu0 0
        %481 = vmatpush.bf16.xpose.msra.mxu0 0
        %482 = vmatpush.bf16.xpose.msra.mxu0 %v460
        %483 = vmatmul.bf16.gmra.mxu0 %v433
        %v484 = vpop.f32.mrf.mxu0
        %v485 = vadd.f32 0.0, %v484
        %v486 = vpop.f32.mrf.mxu0
        %487 = vdwg.mxu0
        %v489 = vsel %vm338, %v431, 0
        %v492 = vsel %vm338, %v389, 0
        %494 = vmatpush.bf16.xpose.msra.mxu0 %v457
        %495 = vmatpush.bf16.xpose.msra.mxu0 %v454
        %496 = vmatpush.bf16.xpose.msra.mxu0 %v451
        %497 = vmatpush.bf16.xpose.msra.mxu0 %v448
        %498 = vmatpush.bf16.xpose.msra.mxu0 %v445
        %499 = vmatpush.bf16.xpose.msra.mxu0 %v442
        %500 = vmatpush.bf16.xpose.msra.mxu0 %v439
        %501 = vmatpush.bf16.xpose.msra.mxu0 %v436
        %502 = vmatmul.bf16.gmra.mxu0 %v489
        %v503 = vpop.f32.mrf.mxu0
        %v504 = vadd.f32 0.0, %v503
        %v505 = vpop.f32.mrf.mxu0
        %506 = vdwg.mxu0
        %507 = vmatpush.bf16.xpose.msra.mxu0 0
        %508 = vmatpush.bf16.xpose.msra.mxu0 0
        %509 = vmatpush.bf16.xpose.msra.mxu0 0
        %510 = vmatpush.bf16.xpose.msra.mxu0 0
        %511 = vmatpush.bf16.xpose.msra.mxu0 0
        %512 = vmatpush.bf16.xpose.msra.mxu0 0
        %513 = vmatpush.bf16.xpose.msra.mxu0 0
        %514 = vmatpush.bf16.xpose.msra.mxu0 %v492
        %515 = vmatmul.bf16.gmra.mxu0 %v489
        %v516 = vpop.f32.mrf.mxu0
        %v517 = vadd.f32 0.0, %v516
        %v518 = vpop.f32.mrf.mxu0
        %519 = vdwg.mxu0
        %vm520 = vcmask 64512
        %v521 = vsel %vm520, %v485, -inf
        %522 = vmax.xlane.f32.xlu0 %v521
        %v523 = vpop.xlane.xlu0 %522
        %v524 = vsel %vm520, %v517, -inf
        %525 = vmax.xlane.f32.xlu0 %v524
        %v526 = vpop.xlane.xlu0 %525
        %v527 = vsub.f32 %v485, %v523
        %v528 = vsub.f32 %v517, %v526
        %v529 = vmul.f32 %v527, 1.442695
        %v530 = vpow.pop %v529
        %v531 = vmul.f32 %v528, 1.442695
        %v532 = vpow.pop %v531
        %v533 = vpack.c.bf16 %v530, %v530
        %v534 = vpack.c.bf16 %v532, %v532
        %v536 = vsel %vm520, %v533, 0
        %vm538 = vcmask 1043456
        %v540 = vsel %vm538, %v386, 0
        %542 = vmatpush.bf16.msra.mxu0 0
        %543 = vmatpush.bf16.msra.mxu0 0
        %544 = vmatpush.bf16.msra.mxu0 0
        %545 = vmatpush.bf16.msra.mxu0 0
        %546 = vmatpush.bf16.msra.mxu0 0
        %547 = vmatpush.bf16.msra.mxu0 0
        %548 = vmatpush.bf16.msra.mxu0 0
        %549 = vmatpush.bf16.msra.mxu0 %v540
        %550 = vmatmul.bf16.gmra.mxu0 %v536
        %v551 = vpop.f32.mrf.mxu0
        %v552 = vadd.f32 0.0, %v551
        %v553 = vpop.f32.mrf.mxu0
        %554 = vdwg.mxu0
        %v556 = vsel %vm520, %v534, 0
        %v559 = vsel %vm538, %v387, 0
        %561 = vmatpush.bf16.msra.mxu0 0
        %562 = vmatpush.bf16.msra.mxu0 0
        %563 = vmatpush.bf16.msra.mxu0 0
        %564 = vmatpush.bf16.msra.mxu0 0
        %565 = vmatpush.bf16.msra.mxu0 0
        %566 = vmatpush.bf16.msra.mxu0 0
        %567 = vmatpush.bf16.msra.mxu0 0
        %568 = vmatpush.bf16.msra.mxu0 %v559
        %569 = vmatmul.bf16.gmra.mxu0 %v556
        %v570 = vpop.f32.mrf.mxu0
        %v571 = vadd.f32 0.0, %v570
        %v572 = vpop.f32.mrf.mxu0
        %573 = vdwg.mxu0
        %v574 = vsel %vm520, %v530, 0.0
        %575 = vadd.xlane.f32.xlu0 %v574
        %v576 = vpop.xlane.xlu0 %575
        %v577 = vsel %vm520, %v532, 0.0
        %578 = vadd.xlane.f32.xlu0 %v577
        %v579 = vpop.xlane.xlu0 %578
        %v580 = vrcp.pop %v576
        %v581 = vrcp.pop %v579
        %v582 = vmul.f32 %v552, %v580
        %v583 = vmul.f32 %v571, %v581
        %v584 = vadd.f32 %v352, %v582
        %v585 = vadd.f32 %v354, %v583
        %v586 = vadd.f32 %v584, %v472
        %v587 = vadd.f32 %v585, %v504
        %v588 = vmul.f32 %v586, 0.5
        %v589 = vmul.f32 %v587, 0.5
        %v590 = vtanh.pop %v588
        %v591 = vtanh.pop %v589
        %v592 = vmul.f32 %v590, 0.5
        %v593 = vmul.f32 %v591, 0.5
        %v594 = vadd.f32 %v592, 0.5
        %v595 = vadd.f32 %v593, 0.5
        %v596 = vtanh.pop %v586
        %v597 = vtanh.pop %v587
        %v598 = vmul.f32 %v594, 0.0
        %v599 = vmul.f32 %v595, 0.0
        %602 = vrot.lane.b32.xlu0 %v596, 64
        %v603 = vpop.permute.xlu0 %602
        %604 = vrot.lane.b32.xlu0 %v597, 64
        %v605 = vpop.permute.xlu0 %604
        %v608 = vmul.f32 %v594, %v603
        %v609 = vmul.f32 %v595, %v605
        %612 = vrot.lane.b32.xlu0 %v608, 32
        %v613 = vpop.permute.xlu0 %612
        %614 = vrot.lane.b32.xlu0 %v609, 32
        %v615 = vpop.permute.xlu0 %614
        %v618 = vadd.f32 %v598, %v613
        %v619 = vadd.f32 %v599, %v615
        %v620 = vtanh.pop %v618
        %v621 = vtanh.pop %v619
        %624 = vrot.lane.b32.xlu0 %v620, 64
        %v625 = vpop.permute.xlu0 %624
        %626 = vrot.lane.b32.xlu0 %v621, 64
        %v627 = vpop.permute.xlu0 %626
        %v630 = vmul.f32 %v594, %v625
        %v631 = vmul.f32 %v595, %v627
        %634 = vrot.lane.b32.xlu0 %v293, 96
        %v635 = vpop.permute.xlu0 %634
        %636 = vrot.lane.b32.xlu0 %v294, 96
        %v637 = vpop.permute.xlu0 %636
        %v640 = vadd.f32 %v630, %v635
        %v641 = vadd.f32 %v631, %v637
        %v642 = vpack.c.bf16 %v640, %v640
        %v643 = vpack.c.bf16 %v641, %v641
        %v645 = vunpack.c.l.b16 %v642
        %v646 = vpack.c.b16 %v645, %v645
        %647 = vrot.lane.b32.xlu0 %v646, 32
        %v648 = vpop.permute.xlu0 %647
        %v650 = vsel %vm338, %v648, 0
        %652 = vmatpush.bf16.xpose.msra.mxu0 %v457
        %653 = vmatpush.bf16.xpose.msra.mxu0 %v454
        %654 = vmatpush.bf16.xpose.msra.mxu0 %v451
        %655 = vmatpush.bf16.xpose.msra.mxu0 %v448
        %656 = vmatpush.bf16.xpose.msra.mxu0 %v445
        %657 = vmatpush.bf16.xpose.msra.mxu0 %v442
        %658 = vmatpush.bf16.xpose.msra.mxu0 %v439
        %659 = vmatpush.bf16.xpose.msra.mxu0 %v436
        %660 = vmatmul.bf16.gmra.mxu0 %v650
        %v661 = vpop.f32.mrf.mxu0
        %v662 = vadd.f32 0.0, %v661
        %v663 = vpop.f32.mrf.mxu0
        %664 = vdwg.mxu0
        %665 = vmatpush.bf16.xpose.msra.mxu0 0
        %666 = vmatpush.bf16.xpose.msra.mxu0 0
        %667 = vmatpush.bf16.xpose.msra.mxu0 0
        %668 = vmatpush.bf16.xpose.msra.mxu0 0
        %669 = vmatpush.bf16.xpose.msra.mxu0 0
        %670 = vmatpush.bf16.xpose.msra.mxu0 0
        %671 = vmatpush.bf16.xpose.msra.mxu0 0
        %672 = vmatpush.bf16.xpose.msra.mxu0 %v460
        %673 = vmatmul.bf16.gmra.mxu0 %v650
        %v674 = vpop.f32.mrf.mxu0
        %v675 = vadd.f32 0.0, %v674
        %v676 = vpop.f32.mrf.mxu0
        %677 = vdwg.mxu0
        %v679 = vunpack.c.l.b16 %v643
        %v680 = vpack.c.b16 %v679, %v679
        %681 = vrot.lane.b32.xlu0 %v680, 32
        %v682 = vpop.permute.xlu0 %681
        %v684 = vsel %vm338, %v682, 0
        %686 = vmatpush.bf16.xpose.msra.mxu0 %v457
        %687 = vmatpush.bf16.xpose.msra.mxu0 %v454
        %688 = vmatpush.bf16.xpose.msra.mxu0 %v451
        %689 = vmatpush.bf16.xpose.msra.mxu0 %v448
        %690 = vmatpush.bf16.xpose.msra.mxu0 %v445
        %691 = vmatpush.bf16.xpose.msra.mxu0 %v442
        %692 = vmatpush.bf16.xpose.msra.mxu0 %v439
        %693 = vmatpush.bf16.xpose.msra.mxu0 %v436
        %694 = vmatmul.bf16.gmra.mxu0 %v684
        %v695 = vpop.f32.mrf.mxu0
        %v696 = vadd.f32 0.0, %v695
        %v697 = vpop.f32.mrf.mxu0
        %698 = vdwg.mxu0
        %699 = vmatpush.bf16.xpose.msra.mxu0 0
        %700 = vmatpush.bf16.xpose.msra.mxu0 0
        %701 = vmatpush.bf16.xpose.msra.mxu0 0
        %702 = vmatpush.bf16.xpose.msra.mxu0 0
        %703 = vmatpush.bf16.xpose.msra.mxu0 0
        %704 = vmatpush.bf16.xpose.msra.mxu0 0
        %705 = vmatpush.bf16.xpose.msra.mxu0 0
        %706 = vmatpush.bf16.xpose.msra.mxu0 %v492
        %707 = vmatmul.bf16.gmra.mxu0 %v684
        %v708 = vpop.f32.mrf.mxu0
        %v709 = vadd.f32 0.0, %v708
        %v710 = vpop.f32.mrf.mxu0
        %711 = vdwg.mxu0
        %v712 = vsel %vm520, %v675, -inf
        %713 = vmax.xlane.f32.xlu0 %v712
        %v714 = vpop.xlane.xlu0 %713
        %v715 = vsel %vm520, %v709, -inf
        %716 = vmax.xlane.f32.xlu0 %v715
        %v717 = vpop.xlane.xlu0 %716
        %v718 = vsub.f32 %v675, %v714
        %v719 = vsub.f32 %v709, %v717
        %v720 = vmul.f32 %v718, 1.442695
        %v721 = vpow.pop %v720
        %v722 = vmul.f32 %v719, 1.442695
        %v723 = vpow.pop %v722
        %v724 = vpack.c.bf16 %v721, %v721
        %v725 = vpack.c.bf16 %v723, %v723
        %v727 = vsel %vm520, %v724, 0
        %729 = vmatpush.bf16.msra.mxu0 0
        %730 = vmatpush.bf16.msra.mxu0 0
        %731 = vmatpush.bf16.msra.mxu0 0
        %732 = vmatpush.bf16.msra.mxu0 0
        %733 = vmatpush.bf16.msra.mxu0 0
        %734 = vmatpush.bf16.msra.mxu0 0
        %735 = vmatpush.bf16.msra.mxu0 0
        %736 = vmatpush.bf16.msra.mxu0 %v540
        %737 = vmatmul.bf16.gmra.mxu0 %v727
        %v738 = vpop.f32.mrf.mxu0
        %v739 = vadd.f32 0.0, %v738
        %v740 = vpop.f32.mrf.mxu0
        %741 = vdwg.mxu0
        %v743 = vsel %vm520, %v725, 0
        %745 = vmatpush.bf16.msra.mxu0 0
        %746 = vmatpush.bf16.msra.mxu0 0
        %747 = vmatpush.bf16.msra.mxu0 0
        %748 = vmatpush.bf16.msra.mxu0 0
        %749 = vmatpush.bf16.msra.mxu0 0
        %750 = vmatpush.bf16.msra.mxu0 0
        %751 = vmatpush.bf16.msra.mxu0 0
        %752 = vmatpush.bf16.msra.mxu0 %v559
        %753 = vmatmul.bf16.gmra.mxu0 %v743
        %v754 = vpop.f32.mrf.mxu0
        %v755 = vadd.f32 0.0, %v754
        %v756 = vpop.f32.mrf.mxu0
        %757 = vdwg.mxu0
        %v758 = vsel %vm520, %v721, 0.0
        %759 = vadd.xlane.f32.xlu0 %v758
        %v760 = vpop.xlane.xlu0 %759
        %v761 = vsel %vm520, %v723, 0.0
        %762 = vadd.xlane.f32.xlu0 %v761
        %v763 = vpop.xlane.xlu0 %762
        %v764 = vrcp.pop %v760
        %v765 = vrcp.pop %v763
        %v766 = vmul.f32 %v739, %v764
        %v767 = vmul.f32 %v755, %v765
        %v768 = vadd.f32 %v352, %v766
        %v769 = vadd.f32 %v354, %v767
        %v770 = vadd.f32 %v768, %v662
        %v771 = vadd.f32 %v769, %v696
        %v772 = vmul.f32 %v770, 0.5
        %v773 = vmul.f32 %v771, 0.5
        %v774 = vtanh.pop %v772
        %v775 = vtanh.pop %v773
        %v776 = vmul.f32 %v774, 0.5
        %v777 = vmul.f32 %v775, 0.5
        %v778 = vadd.f32 %v776, 0.5
        %v779 = vadd.f32 %v777, 0.5
        %v780 = vtanh.pop %v770
        %v781 = vtanh.pop %v771
        %v782 = vmul.f32 %v778, %v618
        %v783 = vmul.f32 %v779, %v619
        %786 = vrot.lane.b32.xlu0 %v780, 64
        %v787 = vpop.permute.xlu0 %786
        %788 = vrot.lane.b32.xlu0 %v781, 64
        %v789 = vpop.permute.xlu0 %788
        %v792 = vmul.f32 %v778, %v787
        %v793 = vmul.f32 %v779, %v789
        %796 = vrot.lane.b32.xlu0 %v792, 32
        %v797 = vpop.permute.xlu0 %796
        %798 = vrot.lane.b32.xlu0 %v793, 32
        %v799 = vpop.permute.xlu0 %798
        %v802 = vadd.f32 %v782, %v797
        %v803 = vadd.f32 %v783, %v799
        %v804 = vtanh.pop %v802
        %v805 = vtanh.pop %v803
        %808 = vrot.lane.b32.xlu0 %v804, 64
        %v809 = vpop.permute.xlu0 %808
        %810 = vrot.lane.b32.xlu0 %v805, 64
        %v811 = vpop.permute.xlu0 %810
        %v814 = vmul.f32 %v778, %v809
        %v815 = vmul.f32 %v779, %v811
        %v816 = vadd.f32 %v814, %v635
        %v817 = vadd.f32 %v815, %v637
        %v818 = vpack.c.bf16 %v816, %v816
        %v819 = vpack.c.bf16 %v817, %v817
        %v821 = vunpack.c.l.b16 %v818
        %v822 = vpack.c.b16 %v821, %v821
        %823 = vrot.lane.b32.xlu0 %v822, 32
        %v824 = vpop.permute.xlu0 %823
        %v826 = vsel %vm338, %v824, 0
        %828 = vmatpush.bf16.xpose.msra.mxu0 %v457
        %829 = vmatpush.bf16.xpose.msra.mxu0 %v454
        %830 = vmatpush.bf16.xpose.msra.mxu0 %v451
        %831 = vmatpush.bf16.xpose.msra.mxu0 %v448
        %832 = vmatpush.bf16.xpose.msra.mxu0 %v445
        %833 = vmatpush.bf16.xpose.msra.mxu0 %v442
        %834 = vmatpush.bf16.xpose.msra.mxu0 %v439
        %835 = vmatpush.bf16.xpose.msra.mxu0 %v436
        %836 = vmatmul.bf16.gmra.mxu0 %v826
        %v837 = vpop.f32.mrf.mxu0
        %v838 = vadd.f32 0.0, %v837
        %v839 = vpop.f32.mrf.mxu0
        %840 = vdwg.mxu0
        %841 = vmatpush.bf16.xpose.msra.mxu0 0
        %842 = vmatpush.bf16.xpose.msra.mxu0 0
        %843 = vmatpush.bf16.xpose.msra.mxu0 0
        %844 = vmatpush.bf16.xpose.msra.mxu0 0
        %845 = vmatpush.bf16.xpose.msra.mxu0 0
        %846 = vmatpush.bf16.xpose.msra.mxu0 0
        %847 = vmatpush.bf16.xpose.msra.mxu0 0
        %848 = vmatpush.bf16.xpose.msra.mxu0 %v460
        %849 = vmatmul.bf16.gmra.mxu0 %v826
        %v850 = vpop.f32.mrf.mxu0
        %v851 = vadd.f32 0.0, %v850
        %v852 = vpop.f32.mrf.mxu0
        %853 = vdwg.mxu0
        %v855 = vunpack.c.l.b16 %v819
        %v856 = vpack.c.b16 %v855, %v855
        %857 = vrot.lane.b32.xlu0 %v856, 32
        %v858 = vpop.permute.xlu0 %857
        %v860 = vsel %vm338, %v858, 0
        %862 = vmatpush.bf16.xpose.msra.mxu0 %v457
        %863 = vmatpush.bf16.xpose.msra.mxu0 %v454
        %864 = vmatpush.bf16.xpose.msra.mxu0 %v451
        %865 = vmatpush.bf16.xpose.msra.mxu0 %v448
        %866 = vmatpush.bf16.xpose.msra.mxu0 %v445
        %867 = vmatpush.bf16.xpose.msra.mxu0 %v442
        %868 = vmatpush.bf16.xpose.msra.mxu0 %v439
        %869 = vmatpush.bf16.xpose.msra.mxu0 %v436
        %870 = vmatmul.bf16.gmra.mxu0 %v860
        %v871 = vpop.f32.mrf.mxu0
        %v872 = vadd.f32 0.0, %v871
        %v873 = vpop.f32.mrf.mxu0
        %874 = vdwg.mxu0
        %875 = vmatpush.bf16.xpose.msra.mxu0 0
        %876 = vmatpush.bf16.xpose.msra.mxu0 0
        %877 = vmatpush.bf16.xpose.msra.mxu0 0
        %878 = vmatpush.bf16.xpose.msra.mxu0 0
        %879 = vmatpush.bf16.xpose.msra.mxu0 0
        %880 = vmatpush.bf16.xpose.msra.mxu0 0
        %881 = vmatpush.bf16.xpose.msra.mxu0 0
        %882 = vmatpush.bf16.xpose.msra.mxu0 %v492
        %883 = vmatmul.bf16.gmra.mxu0 %v860
        %v884 = vpop.f32.mrf.mxu0
        %v885 = vadd.f32 0.0, %v884
        %v886 = vpop.f32.mrf.mxu0
        %887 = vdwg.mxu0
        %v888 = vsel %vm520, %v851, -inf
        %889 = vmax.xlane.f32.xlu0 %v888
        %v890 = vpop.xlane.xlu0 %889
        %v891 = vsel %vm520, %v885, -inf
        %892 = vmax.xlane.f32.xlu0 %v891
        %v893 = vpop.xlane.xlu0 %892
        %v894 = vsub.f32 %v851, %v890
        %v895 = vsub.f32 %v885, %v893
        %v896 = vmul.f32 %v894, 1.442695
        %v897 = vpow.pop %v896
        %v898 = vmul.f32 %v895, 1.442695
        %v899 = vpow.pop %v898
        %v900 = vpack.c.bf16 %v897, %v897
        %v901 = vpack.c.bf16 %v899, %v899
        %v903 = vsel %vm520, %v900, 0
        %905 = vmatpush.bf16.msra.mxu0 0
        %906 = vmatpush.bf16.msra.mxu0 0
        %907 = vmatpush.bf16.msra.mxu0 0
        %908 = vmatpush.bf16.msra.mxu0 0
        %909 = vmatpush.bf16.msra.mxu0 0
        %910 = vmatpush.bf16.msra.mxu0 0
        %911 = vmatpush.bf16.msra.mxu0 0
        %912 = vmatpush.bf16.msra.mxu0 %v540
        %913 = vmatmul.bf16.gmra.mxu0 %v903
        %v914 = vpop.f32.mrf.mxu0
        %v915 = vadd.f32 0.0, %v914
        %v916 = vpop.f32.mrf.mxu0
        %917 = vdwg.mxu0
        %v919 = vsel %vm520, %v901, 0
        %921 = vmatpush.bf16.msra.mxu0 0
        %922 = vmatpush.bf16.msra.mxu0 0
        %923 = vmatpush.bf16.msra.mxu0 0
        %924 = vmatpush.bf16.msra.mxu0 0
        %925 = vmatpush.bf16.msra.mxu0 0
        %926 = vmatpush.bf16.msra.mxu0 0
        %927 = vmatpush.bf16.msra.mxu0 0
        %928 = vmatpush.bf16.msra.mxu0 %v559
        %929 = vmatmul.bf16.gmra.mxu0 %v919
        %v930 = vpop.f32.mrf.mxu0
        %v931 = vadd.f32 0.0, %v930
        %v932 = vpop.f32.mrf.mxu0
        %933 = vdwg.mxu0
        %v934 = vsel %vm520, %v897, 0.0
        %935 = vadd.xlane.f32.xlu0 %v934
        %v936 = vpop.xlane.xlu0 %935
        %v937 = vsel %vm520, %v899, 0.0
        %938 = vadd.xlane.f32.xlu0 %v937
        %v939 = vpop.xlane.xlu0 %938
        %v940 = vrcp.pop %v936
        %v941 = vrcp.pop %v939
        %v942 = vmul.f32 %v915, %v940
        %v943 = vmul.f32 %v931, %v941
        %v944 = vadd.f32 %v352, %v942
        %v945 = vadd.f32 %v354, %v943
        %v946 = vadd.f32 %v944, %v838
        %v947 = vadd.f32 %v945, %v872
        %v948 = vmul.f32 %v946, 0.5
        %v949 = vmul.f32 %v947, 0.5
        %v950 = vtanh.pop %v948
        %v951 = vtanh.pop %v949
        %v952 = vmul.f32 %v950, 0.5
        %v953 = vmul.f32 %v951, 0.5
        %v954 = vadd.f32 %v952, 0.5
        %v955 = vadd.f32 %v953, 0.5
        %v956 = vtanh.pop %v946
        %v957 = vtanh.pop %v947
        %v958 = vmul.f32 %v954, %v802
        %v959 = vmul.f32 %v955, %v803
        %962 = vrot.lane.b32.xlu0 %v956, 64
        %v963 = vpop.permute.xlu0 %962
        %964 = vrot.lane.b32.xlu0 %v957, 64
        %v965 = vpop.permute.xlu0 %964
        %v968 = vmul.f32 %v954, %v963
        %v969 = vmul.f32 %v955, %v965
        %972 = vrot.lane.b32.xlu0 %v968, 32
        %v973 = vpop.permute.xlu0 %972
        %974 = vrot.lane.b32.xlu0 %v969, 32
        %v975 = vpop.permute.xlu0 %974
        %v978 = vadd.f32 %v958, %v973
        %v979 = vadd.f32 %v959, %v975
        %v980 = vtanh.pop %v978
        %v981 = vtanh.pop %v979
        %984 = vrot.lane.b32.xlu0 %v980, 64
        %v985 = vpop.permute.xlu0 %984
        %986 = vrot.lane.b32.xlu0 %v981, 64
        %v987 = vpop.permute.xlu0 %986
        %v990 = vmul.f32 %v954, %v985
        %v991 = vmul.f32 %v955, %v987
        %v992 = vadd.f32 %v990, %v635
        %v993 = vadd.f32 %v991, %v637
        %v994 = vpack.c.bf16 %v992, %v992
        %v995 = vpack.c.bf16 %v993, %v993
        %v997 = vunpack.c.l.b16 %v994
        %v998 = vpack.c.b16 %v997, %v997
        %999 = vrot.lane.b32.xlu0 %v998, 32
        %v1000 = vpop.permute.xlu0 %999
        %v1002 = vsel %vm338, %v1000, 0
        %1004 = vmatpush.bf16.xpose.msra.mxu0 %v457
        %1005 = vmatpush.bf16.xpose.msra.mxu0 %v454
        %1006 = vmatpush.bf16.xpose.msra.mxu0 %v451
        %1007 = vmatpush.bf16.xpose.msra.mxu0 %v448
        %1008 = vmatpush.bf16.xpose.msra.mxu0 %v445
        %1009 = vmatpush.bf16.xpose.msra.mxu0 %v442
        %1010 = vmatpush.bf16.xpose.msra.mxu0 %v439
        %1011 = vmatpush.bf16.xpose.msra.mxu0 %v436
        %1012 = vmatmul.bf16.gmra.mxu0 %v1002
        %v1013 = vpop.f32.mrf.mxu0
        %v1014 = vadd.f32 0.0, %v1013
        %v1015 = vpop.f32.mrf.mxu0
        %1016 = vdwg.mxu0
        %1017 = vmatpush.bf16.xpose.msra.mxu0 0
        %1018 = vmatpush.bf16.xpose.msra.mxu0 0
        %1019 = vmatpush.bf16.xpose.msra.mxu0 0
        %1020 = vmatpush.bf16.xpose.msra.mxu0 0
        %1021 = vmatpush.bf16.xpose.msra.mxu0 0
        %1022 = vmatpush.bf16.xpose.msra.mxu0 0
        %1023 = vmatpush.bf16.xpose.msra.mxu0 0
        %1024 = vmatpush.bf16.xpose.msra.mxu0 %v460
        %1025 = vmatmul.bf16.gmra.mxu0 %v1002
        %v1026 = vpop.f32.mrf.mxu0
        %v1027 = vadd.f32 0.0, %v1026
        %v1028 = vpop.f32.mrf.mxu0
        %1029 = vdwg.mxu0
        %v1031 = vunpack.c.l.b16 %v995
        %v1032 = vpack.c.b16 %v1031, %v1031
        %1033 = vrot.lane.b32.xlu0 %v1032, 32
        %v1034 = vpop.permute.xlu0 %1033
        %v1036 = vsel %vm338, %v1034, 0
        %1038 = vmatpush.bf16.xpose.msra.mxu0 %v457
        %1039 = vmatpush.bf16.xpose.msra.mxu0 %v454
        %1040 = vmatpush.bf16.xpose.msra.mxu0 %v451
        %1041 = vmatpush.bf16.xpose.msra.mxu0 %v448
        %1042 = vmatpush.bf16.xpose.msra.mxu0 %v445
        %1043 = vmatpush.bf16.xpose.msra.mxu0 %v442
        %1044 = vmatpush.bf16.xpose.msra.mxu0 %v439
        %1045 = vmatpush.bf16.xpose.msra.mxu0 %v436
        %1046 = vmatmul.bf16.gmra.mxu0 %v1036
        %v1047 = vpop.f32.mrf.mxu0
        %v1048 = vadd.f32 0.0, %v1047
        %v1049 = vpop.f32.mrf.mxu0
        %1050 = vdwg.mxu0
        %1051 = vmatpush.bf16.xpose.msra.mxu0 0
        %1052 = vmatpush.bf16.xpose.msra.mxu0 0
        %1053 = vmatpush.bf16.xpose.msra.mxu0 0
        %1054 = vmatpush.bf16.xpose.msra.mxu0 0
        %1055 = vmatpush.bf16.xpose.msra.mxu0 0
        %1056 = vmatpush.bf16.xpose.msra.mxu0 0
        %1057 = vmatpush.bf16.xpose.msra.mxu0 0
        %1058 = vmatpush.bf16.xpose.msra.mxu0 %v492
        %1059 = vmatmul.bf16.gmra.mxu0 %v1036
        %v1060 = vpop.f32.mrf.mxu0
        %v1061 = vadd.f32 0.0, %v1060
        %v1062 = vpop.f32.mrf.mxu0
        %1063 = vdwg.mxu0
        %v1064 = vsel %vm520, %v1027, -inf
        %1065 = vmax.xlane.f32.xlu0 %v1064
        %v1066 = vpop.xlane.xlu0 %1065
        %v1067 = vsel %vm520, %v1061, -inf
        %1068 = vmax.xlane.f32.xlu0 %v1067
        %v1069 = vpop.xlane.xlu0 %1068
        %v1070 = vsub.f32 %v1027, %v1066
        %v1071 = vsub.f32 %v1061, %v1069
        %v1072 = vmul.f32 %v1070, 1.442695
        %v1073 = vpow.pop %v1072
        %v1074 = vmul.f32 %v1071, 1.442695
        %v1075 = vpow.pop %v1074
        %v1076 = vpack.c.bf16 %v1073, %v1073
        %v1077 = vpack.c.bf16 %v1075, %v1075
        %v1079 = vsel %vm520, %v1076, 0
        %1081 = vmatpush.bf16.msra.mxu0 0
        %1082 = vmatpush.bf16.msra.mxu0 0
        %1083 = vmatpush.bf16.msra.mxu0 0
        %1084 = vmatpush.bf16.msra.mxu0 0
        %1085 = vmatpush.bf16.msra.mxu0 0
        %1086 = vmatpush.bf16.msra.mxu0 0
        %1087 = vmatpush.bf16.msra.mxu0 0
        %1088 = vmatpush.bf16.msra.mxu0 %v540
        %1089 = vmatmul.bf16.gmra.mxu0 %v1079
        %v1090 = vpop.f32.mrf.mxu0
        %v1091 = vadd.f32 0.0, %v1090
        %v1092 = vpop.f32.mrf.mxu0
        %1093 = vdwg.mxu0
        %v1095 = vsel %vm520, %v1077, 0
        %1097 = vmatpush.bf16.msra.mxu0 0
        %1098 = vmatpush.bf16.msra.mxu0 0
        %1099 = vmatpush.bf16.msra.mxu0 0
        %1100 = vmatpush.bf16.msra.mxu0 0
        %1101 = vmatpush.bf16.msra.mxu0 0
        %1102 = vmatpush.bf16.msra.mxu0 0
        %1103 = vmatpush.bf16.msra.mxu0 0
        %1104 = vmatpush.bf16.msra.mxu0 %v559
        %1105 = vmatmul.bf16.gmra.mxu0 %v1095
        %v1106 = vpop.f32.mrf.mxu0
        %v1107 = vadd.f32 0.0, %v1106
        %v1108 = vpop.f32.mrf.mxu0
        %1109 = vdwg.mxu0
        %v1110 = vsel %vm520, %v1073, 0.0
        %1111 = vadd.xlane.f32.xlu0 %v1110
        %v1112 = vpop.xlane.xlu0 %1111
        %v1113 = vsel %vm520, %v1075, 0.0
        %1114 = vadd.xlane.f32.xlu0 %v1113
        %v1115 = vpop.xlane.xlu0 %1114
        %v1116 = vrcp.pop %v1112
        %v1117 = vrcp.pop %v1115
        %v1118 = vmul.f32 %v1091, %v1116
        %v1119 = vmul.f32 %v1107, %v1117
        %v1120 = vadd.f32 %v352, %v1118
        %v1121 = vadd.f32 %v354, %v1119
        %v1122 = vadd.f32 %v1120, %v1014
        %v1123 = vadd.f32 %v1121, %v1048
        %v1124 = vmul.f32 %v1122, 0.5
        %v1125 = vmul.f32 %v1123, 0.5
        %v1126 = vtanh.pop %v1124
        %v1127 = vtanh.pop %v1125
        %v1128 = vmul.f32 %v1126, 0.5
        %v1129 = vmul.f32 %v1127, 0.5
        %v1130 = vadd.f32 %v1128, 0.5
        %v1131 = vadd.f32 %v1129, 0.5
        %v1132 = vtanh.pop %v1122
        %v1133 = vtanh.pop %v1123
        %v1134 = vmul.f32 %v1130, %v978
        %v1135 = vmul.f32 %v1131, %v979
        %1138 = vrot.lane.b32.xlu0 %v1132, 64
        %v1139 = vpop.permute.xlu0 %1138
        %1140 = vrot.lane.b32.xlu0 %v1133, 64
        %v1141 = vpop.permute.xlu0 %1140
        %v1144 = vmul.f32 %v1130, %v1139
        %v1145 = vmul.f32 %v1131, %v1141
        %1148 = vrot.lane.b32.xlu0 %v1144, 32
        %v1149 = vpop.permute.xlu0 %1148
        %1150 = vrot.lane.b32.xlu0 %v1145, 32
        %v1151 = vpop.permute.xlu0 %1150
        %v1154 = vadd.f32 %v1134, %v1149
        %v1155 = vadd.f32 %v1135, %v1151
        %v1156 = vtanh.pop %v1154
        %v1157 = vtanh.pop %v1155
        %1160 = vrot.lane.b32.xlu0 %v1156, 64
        %v1161 = vpop.permute.xlu0 %1160
        %1162 = vrot.lane.b32.xlu0 %v1157, 64
        %v1163 = vpop.permute.xlu0 %1162
        %v1166 = vmul.f32 %v1130, %v1161
        %v1167 = vmul.f32 %v1131, %v1163
        %v1168 = vadd.f32 %v1166, %v635
        %v1169 = vadd.f32 %v1167, %v637
        %v1170 = vpack.c.bf16 %v1168, %v1168
        %v1171 = vpack.c.bf16 %v1169, %v1169
        %v1173 = vunpack.c.l.b16 %v1170
        %v1174 = vpack.c.b16 %v1173, %v1173
        %1175 = vrot.lane.b32.xlu0 %v1174, 32
        %v1176 = vpop.permute.xlu0 %1175
        %v1178 = vsel %vm338, %v1176, 0
        %1180 = vmatpush.bf16.xpose.msra.mxu0 %v457
        %1181 = vmatpush.bf16.xpose.msra.mxu0 %v454
        %1182 = vmatpush.bf16.xpose.msra.mxu0 %v451
        %1183 = vmatpush.bf16.xpose.msra.mxu0 %v448
        %1184 = vmatpush.bf16.xpose.msra.mxu0 %v445
        %1185 = vmatpush.bf16.xpose.msra.mxu0 %v442
        %1186 = vmatpush.bf16.xpose.msra.mxu0 %v439
        %1187 = vmatpush.bf16.xpose.msra.mxu0 %v436
        %1188 = vmatmul.bf16.gmra.mxu0 %v1178
        %v1189 = vpop.f32.mrf.mxu0
        %v1190 = vadd.f32 0.0, %v1189
        %v1191 = vpop.f32.mrf.mxu0
        %1192 = vdwg.mxu0
        %1193 = vmatpush.bf16.xpose.msra.mxu0 0
        %1194 = vmatpush.bf16.xpose.msra.mxu0 0
        %1195 = vmatpush.bf16.xpose.msra.mxu0 0
        %1196 = vmatpush.bf16.xpose.msra.mxu0 0
        %1197 = vmatpush.bf16.xpose.msra.mxu0 0
        %1198 = vmatpush.bf16.xpose.msra.mxu0 0
        %1199 = vmatpush.bf16.xpose.msra.mxu0 0
        %1200 = vmatpush.bf16.xpose.msra.mxu0 %v460
        %1201 = vmatmul.bf16.gmra.mxu0 %v1178
        %v1202 = vpop.f32.mrf.mxu0
        %v1203 = vadd.f32 0.0, %v1202
        %v1204 = vpop.f32.mrf.mxu0
        %1205 = vdwg.mxu0
        %v1207 = vunpack.c.l.b16 %v1171
        %v1208 = vpack.c.b16 %v1207, %v1207
        %1209 = vrot.lane.b32.xlu0 %v1208, 32
        %v1210 = vpop.permute.xlu0 %1209
        %v1212 = vsel %vm338, %v1210, 0
        %1214 = vmatpush.bf16.xpose.msra.mxu0 %v457
        %1215 = vmatpush.bf16.xpose.msra.mxu0 %v454
        %1216 = vmatpush.bf16.xpose.msra.mxu0 %v451
        %1217 = vmatpush.bf16.xpose.msra.mxu0 %v448
        %1218 = vmatpush.bf16.xpose.msra.mxu0 %v445
        %1219 = vmatpush.bf16.xpose.msra.mxu0 %v442
        %1220 = vmatpush.bf16.xpose.msra.mxu0 %v439
        %1221 = vmatpush.bf16.xpose.msra.mxu0 %v436
        %1222 = vmatmul.bf16.gmra.mxu0 %v1212
        %v1223 = vpop.f32.mrf.mxu0
        %v1224 = vadd.f32 0.0, %v1223
        %v1225 = vpop.f32.mrf.mxu0
        %1226 = vdwg.mxu0
        %1227 = vmatpush.bf16.xpose.msra.mxu0 0
        %1228 = vmatpush.bf16.xpose.msra.mxu0 0
        %1229 = vmatpush.bf16.xpose.msra.mxu0 0
        %1230 = vmatpush.bf16.xpose.msra.mxu0 0
        %1231 = vmatpush.bf16.xpose.msra.mxu0 0
        %1232 = vmatpush.bf16.xpose.msra.mxu0 0
        %1233 = vmatpush.bf16.xpose.msra.mxu0 0
        %1234 = vmatpush.bf16.xpose.msra.mxu0 %v492
        %1235 = vmatmul.bf16.gmra.mxu0 %v1212
        %v1236 = vpop.f32.mrf.mxu0
        %v1237 = vadd.f32 0.0, %v1236
        %v1238 = vpop.f32.mrf.mxu0
        %1239 = vdwg.mxu0
        %v1240 = vsel %vm520, %v1203, -inf
        %1241 = vmax.xlane.f32.xlu0 %v1240
        %v1242 = vpop.xlane.xlu0 %1241
        %v1243 = vsel %vm520, %v1237, -inf
        %1244 = vmax.xlane.f32.xlu0 %v1243
        %v1245 = vpop.xlane.xlu0 %1244
        %v1246 = vsub.f32 %v1203, %v1242
        %v1247 = vsub.f32 %v1237, %v1245
        %v1248 = vmul.f32 %v1246, 1.442695
        %v1249 = vpow.pop %v1248
        %v1250 = vmul.f32 %v1247, 1.442695
        %v1251 = vpow.pop %v1250
        %v1252 = vpack.c.bf16 %v1249, %v1249
        %v1253 = vpack.c.bf16 %v1251, %v1251
        %v1255 = vsel %vm520, %v1252, 0
        %1257 = vmatpush.bf16.msra.mxu0 0
        %1258 = vmatpush.bf16.msra.mxu0 0
        %1259 = vmatpush.bf16.msra.mxu0 0
        %1260 = vmatpush.bf16.msra.mxu0 0
        %1261 = vmatpush.bf16.msra.mxu0 0
        %1262 = vmatpush.bf16.msra.mxu0 0
        %1263 = vmatpush.bf16.msra.mxu0 0
        %1264 = vmatpush.bf16.msra.mxu0 %v540
        %1265 = vmatmul.bf16.gmra.mxu0 %v1255
        %v1266 = vpop.f32.mrf.mxu0
        %v1267 = vadd.f32 0.0, %v1266
        %v1268 = vpop.f32.mrf.mxu0
        %1269 = vdwg.mxu0
        %v1271 = vsel %vm520, %v1253, 0
        %1273 = vmatpush.bf16.msra.mxu0 0
        %1274 = vmatpush.bf16.msra.mxu0 0
        %1275 = vmatpush.bf16.msra.mxu0 0
        %1276 = vmatpush.bf16.msra.mxu0 0
        %1277 = vmatpush.bf16.msra.mxu0 0
        %1278 = vmatpush.bf16.msra.mxu0 0
        %1279 = vmatpush.bf16.msra.mxu0 0
        %1280 = vmatpush.bf16.msra.mxu0 %v559
        %1281 = vmatmul.bf16.gmra.mxu0 %v1271
        %v1282 = vpop.f32.mrf.mxu0
        %v1283 = vadd.f32 0.0, %v1282
        %v1284 = vpop.f32.mrf.mxu0
        %1285 = vdwg.mxu0
        %v1286 = vsel %vm520, %v1249, 0.0
        %1287 = vadd.xlane.f32.xlu0 %v1286
        %v1288 = vpop.xlane.xlu0 %1287
        %v1289 = vsel %vm520, %v1251, 0.0
        %1290 = vadd.xlane.f32.xlu0 %v1289
        %v1291 = vpop.xlane.xlu0 %1290
        %v1292 = vrcp.pop %v1288
        %v1293 = vrcp.pop %v1291
        %v1294 = vmul.f32 %v1267, %v1292
        %v1295 = vmul.f32 %v1283, %v1293
        %v1296 = vadd.f32 %v352, %v1294
        %v1297 = vadd.f32 %v354, %v1295
        %v1298 = vadd.f32 %v1296, %v1190
        %v1299 = vadd.f32 %v1297, %v1224
        %v1300 = vmul.f32 %v1298, 0.5
        %v1301 = vmul.f32 %v1299, 0.5
        %v1302 = vtanh.pop %v1300
        %v1303 = vtanh.pop %v1301
        %v1304 = vmul.f32 %v1302, 0.5
        %v1305 = vmul.f32 %v1303, 0.5
        %v1306 = vadd.f32 %v1304, 0.5
        %v1307 = vadd.f32 %v1305, 0.5
        %v1308 = vtanh.pop %v1298
        %v1309 = vtanh.pop %v1299
        %v1310 = vmul.f32 %v1306, %v1154
        %v1311 = vmul.f32 %v1307, %v1155
        %1314 = vrot.lane.b32.xlu0 %v1308, 64
        %v1315 = vpop.permute.xlu0 %1314
        %1316 = vrot.lane.b32.xlu0 %v1309, 64
        %v1317 = vpop.permute.xlu0 %1316
        %v1320 = vmul.f32 %v1306, %v1315
        %v1321 = vmul.f32 %v1307, %v1317
        %1324 = vrot.lane.b32.xlu0 %v1320, 32
        %v1325 = vpop.permute.xlu0 %1324
        %1326 = vrot.lane.b32.xlu0 %v1321, 32
        %v1327 = vpop.permute.xlu0 %1326
        %v1330 = vadd.f32 %v1310, %v1325
        %v1331 = vadd.f32 %v1311, %v1327
        %v1332 = vtanh.pop %v1330
        %v1333 = vtanh.pop %v1331
        %1336 = vrot.lane.b32.xlu0 %v1332, 64
        %v1337 = vpop.permute.xlu0 %1336
        %1338 = vrot.lane.b32.xlu0 %v1333, 64
        %v1339 = vpop.permute.xlu0 %1338
        %v1342 = vmul.f32 %v1306, %v1337
        %v1343 = vmul.f32 %v1307, %v1339
        %v1344 = vadd.f32 %v1342, %v635
        %v1345 = vadd.f32 %v1343, %v637
        %v1346 = vpack.c.bf16 %v1344, %v1344
        %v1347 = vpack.c.bf16 %v1345, %v1345
        %v1349 = vunpack.c.l.b16 %v1346
        %v1350 = vpack.c.b16 %v1349, %v1349
        %1351 = vrot.lane.b32.xlu0 %v1350, 32
        %v1352 = vpop.permute.xlu0 %1351
        %v1354 = vsel %vm338, %v1352, 0
        %1356 = vmatpush.bf16.xpose.msra.mxu0 %v457
        %1357 = vmatpush.bf16.xpose.msra.mxu0 %v454
        %1358 = vmatpush.bf16.xpose.msra.mxu0 %v451
        %1359 = vmatpush.bf16.xpose.msra.mxu0 %v448
        %1360 = vmatpush.bf16.xpose.msra.mxu0 %v445
        %1361 = vmatpush.bf16.xpose.msra.mxu0 %v442
        %1362 = vmatpush.bf16.xpose.msra.mxu0 %v439
        %1363 = vmatpush.bf16.xpose.msra.mxu0 %v436
        %1364 = vmatmul.bf16.gmra.mxu0 %v1354
        %v1365 = vpop.f32.mrf.mxu0
        %v1366 = vadd.f32 0.0, %v1365
        %v1367 = vpop.f32.mrf.mxu0
        %1368 = vdwg.mxu0
        %1369 = vmatpush.bf16.xpose.msra.mxu0 0
        %1370 = vmatpush.bf16.xpose.msra.mxu0 0
        %1371 = vmatpush.bf16.xpose.msra.mxu0 0
        %1372 = vmatpush.bf16.xpose.msra.mxu0 0
        %1373 = vmatpush.bf16.xpose.msra.mxu0 0
        %1374 = vmatpush.bf16.xpose.msra.mxu0 0
        %1375 = vmatpush.bf16.xpose.msra.mxu0 0
        %1376 = vmatpush.bf16.xpose.msra.mxu0 %v460
        %1377 = vmatmul.bf16.gmra.mxu0 %v1354
        %v1378 = vpop.f32.mrf.mxu0
        %v1379 = vadd.f32 0.0, %v1378
        %v1380 = vpop.f32.mrf.mxu0
        %1381 = vdwg.mxu0
        %v1383 = vunpack.c.l.b16 %v1347
        %v1384 = vpack.c.b16 %v1383, %v1383
        %1385 = vrot.lane.b32.xlu0 %v1384, 32
        %v1386 = vpop.permute.xlu0 %1385
        %v1388 = vsel %vm338, %v1386, 0
        %1390 = vmatpush.bf16.xpose.msra.mxu0 %v457
        %1391 = vmatpush.bf16.xpose.msra.mxu0 %v454
        %1392 = vmatpush.bf16.xpose.msra.mxu0 %v451
        %1393 = vmatpush.bf16.xpose.msra.mxu0 %v448
        %1394 = vmatpush.bf16.xpose.msra.mxu0 %v445
        %1395 = vmatpush.bf16.xpose.msra.mxu0 %v442
        %1396 = vmatpush.bf16.xpose.msra.mxu0 %v439
        %1397 = vmatpush.bf16.xpose.msra.mxu0 %v436
        %1398 = vmatmul.bf16.gmra.mxu0 %v1388
        %v1399 = vpop.f32.mrf.mxu0
        %v1400 = vadd.f32 0.0, %v1399
        %v1401 = vpop.f32.mrf.mxu0
        %1402 = vdwg.mxu0
        %1403 = vmatpush.bf16.xpose.msra.mxu0 0
        %1404 = vmatpush.bf16.xpose.msra.mxu0 0
        %1405 = vmatpush.bf16.xpose.msra.mxu0 0
        %1406 = vmatpush.bf16.xpose.msra.mxu0 0
        %1407 = vmatpush.bf16.xpose.msra.mxu0 0
        %1408 = vmatpush.bf16.xpose.msra.mxu0 0
        %1409 = vmatpush.bf16.xpose.msra.mxu0 0
        %1410 = vmatpush.bf16.xpose.msra.mxu0 %v492
        %1411 = vmatmul.bf16.gmra.mxu0 %v1388
        %v1412 = vpop.f32.mrf.mxu0
        %v1413 = vadd.f32 0.0, %v1412
        %v1414 = vpop.f32.mrf.mxu0
        %1415 = vdwg.mxu0
        %v1416 = vsel %vm520, %v1379, -inf
        %1417 = vmax.xlane.f32.xlu0 %v1416
        %v1418 = vpop.xlane.xlu0 %1417
        %v1419 = vsel %vm520, %v1413, -inf
        %1420 = vmax.xlane.f32.xlu0 %v1419
        %v1421 = vpop.xlane.xlu0 %1420
        %v1422 = vsub.f32 %v1379, %v1418
        %v1423 = vsub.f32 %v1413, %v1421
        %v1424 = vmul.f32 %v1422, 1.442695
        %v1425 = vpow.pop %v1424
        %v1426 = vmul.f32 %v1423, 1.442695
        %v1427 = vpow.pop %v1426
        %v1428 = vpack.c.bf16 %v1425, %v1425
        %v1429 = vpack.c.bf16 %v1427, %v1427
        %v1431 = vsel %vm520, %v1428, 0
        %1433 = vmatpush.bf16.msra.mxu0 0
        %1434 = vmatpush.bf16.msra.mxu0 0
        %1435 = vmatpush.bf16.msra.mxu0 0
        %1436 = vmatpush.bf16.msra.mxu0 0
        %1437 = vmatpush.bf16.msra.mxu0 0
        %1438 = vmatpush.bf16.msra.mxu0 0
        %1439 = vmatpush.bf16.msra.mxu0 0
        %1440 = vmatpush.bf16.msra.mxu0 %v540
        %1441 = vmatmul.bf16.gmra.mxu0 %v1431
        %v1442 = vpop.f32.mrf.mxu0
        %v1443 = vadd.f32 0.0, %v1442
        %v1444 = vpop.f32.mrf.mxu0
        %1445 = vdwg.mxu0
        %v1447 = vsel %vm520, %v1429, 0
        %1449 = vmatpush.bf16.msra.mxu0 0
        %1450 = vmatpush.bf16.msra.mxu0 0
        %1451 = vmatpush.bf16.msra.mxu0 0
        %1452 = vmatpush.bf16.msra.mxu0 0
        %1453 = vmatpush.bf16.msra.mxu0 0
        %1454 = vmatpush.bf16.msra.mxu0 0
        %1455 = vmatpush.bf16.msra.mxu0 0
        %1456 = vmatpush.bf16.msra.mxu0 %v559
        %1457 = vmatmul.bf16.gmra.mxu0 %v1447
        %v1458 = vpop.f32.mrf.mxu0
        %v1459 = vadd.f32 0.0, %v1458
        %v1460 = vpop.f32.mrf.mxu0
        %1461 = vdwg.mxu0
        %v1462 = vsel %vm520, %v1425, 0.0
        %1463 = vadd.xlane.f32.xlu0 %v1462
        %v1464 = vpop.xlane.xlu0 %1463
        %v1465 = vsel %vm520, %v1427, 0.0
        %1466 = vadd.xlane.f32.xlu0 %v1465
        %v1467 = vpop.xlane.xlu0 %1466
        %v1468 = vrcp.pop %v1464
        %v1469 = vrcp.pop %v1467
        %v1470 = vmul.f32 %v1443, %v1468
        %v1471 = vmul.f32 %v1459, %v1469
        %v1472 = vadd.f32 %v352, %v1470
        %v1473 = vadd.f32 %v354, %v1471
        %v1474 = vadd.f32 %v1472, %v1366
        %v1475 = vadd.f32 %v1473, %v1400
        %v1476 = vmul.f32 %v1474, 0.5
        %v1477 = vmul.f32 %v1475, 0.5
        %v1478 = vtanh.pop %v1476
        %v1479 = vtanh.pop %v1477
        %v1480 = vmul.f32 %v1478, 0.5
        %v1481 = vmul.f32 %v1479, 0.5
        %v1482 = vadd.f32 %v1480, 0.5
        %v1483 = vadd.f32 %v1481, 0.5
        %v1484 = vtanh.pop %v1474
        %v1485 = vtanh.pop %v1475
        %v1486 = vmul.f32 %v1482, %v1330
        %v1487 = vmul.f32 %v1483, %v1331
        %1490 = vrot.lane.b32.xlu0 %v1484, 64
        %v1491 = vpop.permute.xlu0 %1490
        %1492 = vrot.lane.b32.xlu0 %v1485, 64
        %v1493 = vpop.permute.xlu0 %1492
        %v1496 = vmul.f32 %v1482, %v1491
        %v1497 = vmul.f32 %v1483, %v1493
        %1500 = vrot.lane.b32.xlu0 %v1496, 32
        %v1501 = vpop.permute.xlu0 %1500
        %1502 = vrot.lane.b32.xlu0 %v1497, 32
        %v1503 = vpop.permute.xlu0 %1502
        %v1506 = vadd.f32 %v1486, %v1501
        %v1507 = vadd.f32 %v1487, %v1503
        %v1508 = vtanh.pop %v1506
        %v1509 = vtanh.pop %v1507
        %1512 = vrot.lane.b32.xlu0 %v1508, 64
        %v1513 = vpop.permute.xlu0 %1512
        %1514 = vrot.lane.b32.xlu0 %v1509, 64
        %v1515 = vpop.permute.xlu0 %1514
        %v1518 = vmul.f32 %v1482, %v1513
        %v1519 = vmul.f32 %v1483, %v1515
        %v1520 = vadd.f32 %v1518, %v635
        %v1521 = vadd.f32 %v1519, %v637
        %v1522 = vpack.c.bf16 %v1520, %v1520
        %v1523 = vpack.c.bf16 %v1521, %v1521
        %v1525 = vunpack.c.l.b16 %v1522
        %v1526 = vpack.c.b16 %v1525, %v1525
        %1527 = vrot.lane.b32.xlu0 %v1526, 32
        %v1528 = vpop.permute.xlu0 %1527
        %v1530 = vsel %vm338, %v1528, 0
        %1532 = vmatpush.bf16.xpose.msra.mxu0 %v457
        %1533 = vmatpush.bf16.xpose.msra.mxu0 %v454
        %1534 = vmatpush.bf16.xpose.msra.mxu0 %v451
        %1535 = vmatpush.bf16.xpose.msra.mxu0 %v448
        %1536 = vmatpush.bf16.xpose.msra.mxu0 %v445
        %1537 = vmatpush.bf16.xpose.msra.mxu0 %v442
        %1538 = vmatpush.bf16.xpose.msra.mxu0 %v439
        %1539 = vmatpush.bf16.xpose.msra.mxu0 %v436
        %1540 = vmatmul.bf16.gmra.mxu0 %v1530
        %v1541 = vpop.f32.mrf.mxu0
        %v1542 = vadd.f32 0.0, %v1541
        %v1543 = vpop.f32.mrf.mxu0
        %1544 = vdwg.mxu0
        %1545 = vmatpush.bf16.xpose.msra.mxu0 0
        %1546 = vmatpush.bf16.xpose.msra.mxu0 0
        %1547 = vmatpush.bf16.xpose.msra.mxu0 0
        %1548 = vmatpush.bf16.xpose.msra.mxu0 0
        %1549 = vmatpush.bf16.xpose.msra.mxu0 0
        %1550 = vmatpush.bf16.xpose.msra.mxu0 0
        %1551 = vmatpush.bf16.xpose.msra.mxu0 0
        %1552 = vmatpush.bf16.xpose.msra.mxu0 %v460
        %1553 = vmatmul.bf16.gmra.mxu0 %v1530
        %v1554 = vpop.f32.mrf.mxu0
        %v1555 = vadd.f32 0.0, %v1554
        %v1556 = vpop.f32.mrf.mxu0
        %1557 = vdwg.mxu0
        %v1559 = vunpack.c.l.b16 %v1523
        %v1560 = vpack.c.b16 %v1559, %v1559
        %1561 = vrot.lane.b32.xlu0 %v1560, 32
        %v1562 = vpop.permute.xlu0 %1561
        %v1564 = vsel %vm338, %v1562, 0
        %1566 = vmatpush.bf16.xpose.msra.mxu0 %v457
        %1567 = vmatpush.bf16.xpose.msra.mxu0 %v454
        %1568 = vmatpush.bf16.xpose.msra.mxu0 %v451
        %1569 = vmatpush.bf16.xpose.msra.mxu0 %v448
        %1570 = vmatpush.bf16.xpose.msra.mxu0 %v445
        %1571 = vmatpush.bf16.xpose.msra.mxu0 %v442
        %1572 = vmatpush.bf16.xpose.msra.mxu0 %v439
        %1573 = vmatpush.bf16.xpose.msra.mxu0 %v436
        %1574 = vmatmul.bf16.gmra.mxu0 %v1564
        %v1575 = vpop.f32.mrf.mxu0
        %v1576 = vadd.f32 0.0, %v1575
        %v1577 = vpop.f32.mrf.mxu0
        %1578 = vdwg.mxu0
        %1579 = vmatpush.bf16.xpose.msra.mxu0 0
        %1580 = vmatpush.bf16.xpose.msra.mxu0 0
        %1581 = vmatpush.bf16.xpose.msra.mxu0 0
        %1582 = vmatpush.bf16.xpose.msra.mxu0 0
        %1583 = vmatpush.bf16.xpose.msra.mxu0 0
        %1584 = vmatpush.bf16.xpose.msra.mxu0 0
        %1585 = vmatpush.bf16.xpose.msra.mxu0 0
        %1586 = vmatpush.bf16.xpose.msra.mxu0 %v492
        %1587 = vmatmul.bf16.gmra.mxu0 %v1564
        %v1588 = vpop.f32.mrf.mxu0
        %v1589 = vadd.f32 0.0, %v1588
        %v1590 = vpop.f32.mrf.mxu0
        %1591 = vdwg.mxu0
        %v1592 = vsel %vm520, %v1555, -inf
        %1593 = vmax.xlane.f32.xlu0 %v1592
        %v1594 = vpop.xlane.xlu0 %1593
        %v1595 = vsel %vm520, %v1589, -inf
        %1596 = vmax.xlane.f32.xlu0 %v1595
        %v1597 = vpop.xlane.xlu0 %1596
        %v1598 = vsub.f32 %v1555, %v1594
        %v1599 = vsub.f32 %v1589, %v1597
        %v1600 = vmul.f32 %v1598, 1.442695
        %v1601 = vpow.pop %v1600
        %v1602 = vmul.f32 %v1599, 1.442695
        %v1603 = vpow.pop %v1602
        %v1604 = vpack.c.bf16 %v1601, %v1601
        %v1605 = vpack.c.bf16 %v1603, %v1603
        %v1607 = vsel %vm520, %v1604, 0
        %1609 = vmatpush.bf16.msra.mxu0 0
        %1610 = vmatpush.bf16.msra.mxu0 0
        %1611 = vmatpush.bf16.msra.mxu0 0
        %1612 = vmatpush.bf16.msra.mxu0 0
        %1613 = vmatpush.bf16.msra.mxu0 0
        %1614 = vmatpush.bf16.msra.mxu0 0
        %1615 = vmatpush.bf16.msra.mxu0 0
        %1616 = vmatpush.bf16.msra.mxu0 %v540
        %1617 = vmatmul.bf16.gmra.mxu0 %v1607
        %v1618 = vpop.f32.mrf.mxu0
        %v1619 = vadd.f32 0.0, %v1618
        %v1620 = vpop.f32.mrf.mxu0
        %1621 = vdwg.mxu0
        %v1623 = vsel %vm520, %v1605, 0
        %1625 = vmatpush.bf16.msra.mxu0 0
        %1626 = vmatpush.bf16.msra.mxu0 0
        %1627 = vmatpush.bf16.msra.mxu0 0
        %1628 = vmatpush.bf16.msra.mxu0 0
        %1629 = vmatpush.bf16.msra.mxu0 0
        %1630 = vmatpush.bf16.msra.mxu0 0
        %1631 = vmatpush.bf16.msra.mxu0 0
        %1632 = vmatpush.bf16.msra.mxu0 %v559
        %1633 = vmatmul.bf16.gmra.mxu0 %v1623
        %v1634 = vpop.f32.mrf.mxu0
        %v1635 = vadd.f32 0.0, %v1634
        %v1636 = vpop.f32.mrf.mxu0
        %1637 = vdwg.mxu0
        %v1638 = vsel %vm520, %v1601, 0.0
        %1639 = vadd.xlane.f32.xlu0 %v1638
        %v1640 = vpop.xlane.xlu0 %1639
        %v1641 = vsel %vm520, %v1603, 0.0
        %1642 = vadd.xlane.f32.xlu0 %v1641
        %v1643 = vpop.xlane.xlu0 %1642
        %v1644 = vrcp.pop %v1640
        %v1645 = vrcp.pop %v1643
        %v1646 = vmul.f32 %v1619, %v1644
        %v1647 = vmul.f32 %v1635, %v1645
        %v1648 = vadd.f32 %v352, %v1646
        %v1649 = vadd.f32 %v354, %v1647
        %v1650 = vadd.f32 %v1648, %v1542
        %v1651 = vadd.f32 %v1649, %v1576
        %v1652 = vmul.f32 %v1650, 0.5
        %v1653 = vmul.f32 %v1651, 0.5
        %v1654 = vtanh.pop %v1652
        %v1655 = vtanh.pop %v1653
        %v1656 = vmul.f32 %v1654, 0.5
        %v1657 = vmul.f32 %v1655, 0.5
        %v1658 = vadd.f32 %v1656, 0.5
        %v1659 = vadd.f32 %v1657, 0.5
        %v1660 = vtanh.pop %v1650
        %v1661 = vtanh.pop %v1651
        %v1662 = vmul.f32 %v1658, %v1506
        %v1663 = vmul.f32 %v1659, %v1507
        %1666 = vrot.lane.b32.xlu0 %v1660, 64
        %v1667 = vpop.permute.xlu0 %1666
        %1668 = vrot.lane.b32.xlu0 %v1661, 64
        %v1669 = vpop.permute.xlu0 %1668
        %v1672 = vmul.f32 %v1658, %v1667
        %v1673 = vmul.f32 %v1659, %v1669
        %1676 = vrot.lane.b32.xlu0 %v1672, 32
        %v1677 = vpop.permute.xlu0 %1676
        %1678 = vrot.lane.b32.xlu0 %v1673, 32
        %v1679 = vpop.permute.xlu0 %1678
        %v1682 = vadd.f32 %v1662, %v1677
        %v1683 = vadd.f32 %v1663, %v1679
        %v1684 = vtanh.pop %v1682
        %v1685 = vtanh.pop %v1683
        %1688 = vrot.lane.b32.xlu0 %v1684, 64
        %v1689 = vpop.permute.xlu0 %1688
        %1690 = vrot.lane.b32.xlu0 %v1685, 64
        %v1691 = vpop.permute.xlu0 %1690
        %v1694 = vmul.f32 %v1658, %v1689
        %v1695 = vmul.f32 %v1659, %v1691
        %v1696 = vadd.f32 %v1694, %v635
        %v1697 = vadd.f32 %v1695, %v637
        %v1698 = vpack.c.bf16 %v1696, %v1696
        %v1699 = vpack.c.bf16 %v1697, %v1697
        %v1701 = vunpack.c.l.b16 %v1698
        %v1702 = vpack.c.b16 %v1701, %v1701
        %1703 = vrot.lane.b32.xlu0 %v1702, 32
        %v1704 = vpop.permute.xlu0 %1703
        %v1706 = vsel %vm338, %v1704, 0
        %1708 = vmatpush.bf16.xpose.msra.mxu0 %v457
        %1709 = vmatpush.bf16.xpose.msra.mxu0 %v454
        %1710 = vmatpush.bf16.xpose.msra.mxu0 %v451
        %1711 = vmatpush.bf16.xpose.msra.mxu0 %v448
        %1712 = vmatpush.bf16.xpose.msra.mxu0 %v445
        %1713 = vmatpush.bf16.xpose.msra.mxu0 %v442
        %1714 = vmatpush.bf16.xpose.msra.mxu0 %v439
        %1715 = vmatpush.bf16.xpose.msra.mxu0 %v436
        %1716 = vmatmul.bf16.gmra.mxu0 %v1706
        %v1717 = vpop.f32.mrf.mxu0
        %v1718 = vadd.f32 0.0, %v1717
        %v1719 = vpop.f32.mrf.mxu0
        %1720 = vdwg.mxu0
        %1721 = vmatpush.bf16.xpose.msra.mxu0 0
        %1722 = vmatpush.bf16.xpose.msra.mxu0 0
        %1723 = vmatpush.bf16.xpose.msra.mxu0 0
        %1724 = vmatpush.bf16.xpose.msra.mxu0 0
        %1725 = vmatpush.bf16.xpose.msra.mxu0 0
        %1726 = vmatpush.bf16.xpose.msra.mxu0 0
        %1727 = vmatpush.bf16.xpose.msra.mxu0 0
        %1728 = vmatpush.bf16.xpose.msra.mxu0 %v460
        %1729 = vmatmul.bf16.gmra.mxu0 %v1706
        %v1730 = vpop.f32.mrf.mxu0
        %v1731 = vadd.f32 0.0, %v1730
        %v1732 = vpop.f32.mrf.mxu0
        %1733 = vdwg.mxu0
        %v1735 = vunpack.c.l.b16 %v1699
        %v1736 = vpack.c.b16 %v1735, %v1735
        %1737 = vrot.lane.b32.xlu0 %v1736, 32
        %v1738 = vpop.permute.xlu0 %1737
        %v1740 = vsel %vm338, %v1738, 0
        %1742 = vmatpush.bf16.xpose.msra.mxu0 %v457
        %1743 = vmatpush.bf16.xpose.msra.mxu0 %v454
        %1744 = vmatpush.bf16.xpose.msra.mxu0 %v451
        %1745 = vmatpush.bf16.xpose.msra.mxu0 %v448
        %1746 = vmatpush.bf16.xpose.msra.mxu0 %v445
        %1747 = vmatpush.bf16.xpose.msra.mxu0 %v442
        %1748 = vmatpush.bf16.xpose.msra.mxu0 %v439
        %1749 = vmatpush.bf16.xpose.msra.mxu0 %v436
        %1750 = vmatmul.bf16.gmra.mxu0 %v1740
        %v1751 = vpop.f32.mrf.mxu0
        %v1752 = vadd.f32 0.0, %v1751
        %v1753 = vpop.f32.mrf.mxu0
        %1754 = vdwg.mxu0
        %1755 = vmatpush.bf16.xpose.msra.mxu0 0
        %1756 = vmatpush.bf16.xpose.msra.mxu0 0
        %1757 = vmatpush.bf16.xpose.msra.mxu0 0
        %1758 = vmatpush.bf16.xpose.msra.mxu0 0
        %1759 = vmatpush.bf16.xpose.msra.mxu0 0
        %1760 = vmatpush.bf16.xpose.msra.mxu0 0
        %1761 = vmatpush.bf16.xpose.msra.mxu0 0
        %1762 = vmatpush.bf16.xpose.msra.mxu0 %v492
        %1763 = vmatmul.bf16.gmra.mxu0 %v1740
        %v1764 = vpop.f32.mrf.mxu0
        %v1765 = vadd.f32 0.0, %v1764
        %v1766 = vpop.f32.mrf.mxu0
        %1767 = vdwg.mxu0
        %v1768 = vsel %vm520, %v1731, -inf
        %1769 = vmax.xlane.f32.xlu0 %v1768
        %v1770 = vpop.xlane.xlu0 %1769
        %v1771 = vsel %vm520, %v1765, -inf
        %1772 = vmax.xlane.f32.xlu0 %v1771
        %v1773 = vpop.xlane.xlu0 %1772
        %v1774 = vsub.f32 %v1731, %v1770
        %v1775 = vsub.f32 %v1765, %v1773
        %v1776 = vmul.f32 %v1774, 1.442695
        %v1777 = vpow.pop %v1776
        %v1778 = vmul.f32 %v1775, 1.442695
        %v1779 = vpow.pop %v1778
        %v1780 = vpack.c.bf16 %v1777, %v1777
        %v1781 = vpack.c.bf16 %v1779, %v1779
        %v1783 = vsel %vm520, %v1780, 0
        %1785 = vmatpush.bf16.msra.mxu0 0
        %1786 = vmatpush.bf16.msra.mxu0 0
        %1787 = vmatpush.bf16.msra.mxu0 0
        %1788 = vmatpush.bf16.msra.mxu0 0
        %1789 = vmatpush.bf16.msra.mxu0 0
        %1790 = vmatpush.bf16.msra.mxu0 0
        %1791 = vmatpush.bf16.msra.mxu0 0
        %1792 = vmatpush.bf16.msra.mxu0 %v540
        %1793 = vmatmul.bf16.gmra.mxu0 %v1783
        %v1794 = vpop.f32.mrf.mxu0
        %v1795 = vadd.f32 0.0, %v1794
        %v1796 = vpop.f32.mrf.mxu0
        %1797 = vdwg.mxu0
        %v1799 = vsel %vm520, %v1781, 0
        %1801 = vmatpush.bf16.msra.mxu0 0
        %1802 = vmatpush.bf16.msra.mxu0 0
        %1803 = vmatpush.bf16.msra.mxu0 0
        %1804 = vmatpush.bf16.msra.mxu0 0
        %1805 = vmatpush.bf16.msra.mxu0 0
        %1806 = vmatpush.bf16.msra.mxu0 0
        %1807 = vmatpush.bf16.msra.mxu0 0
        %1808 = vmatpush.bf16.msra.mxu0 %v559
        %1809 = vmatmul.bf16.gmra.mxu0 %v1799
        %v1810 = vpop.f32.mrf.mxu0
        %v1811 = vadd.f32 0.0, %v1810
        %v1812 = vpop.f32.mrf.mxu0
        %1813 = vdwg.mxu0
        %v1814 = vsel %vm520, %v1777, 0.0
        %1815 = vadd.xlane.f32.xlu0 %v1814
        %v1816 = vpop.xlane.xlu0 %1815
        %v1817 = vsel %vm520, %v1779, 0.0
        %1818 = vadd.xlane.f32.xlu0 %v1817
        %v1819 = vpop.xlane.xlu0 %1818
        %v1820 = vrcp.pop %v1816
        %v1821 = vrcp.pop %v1819
        %v1822 = vmul.f32 %v1795, %v1820
        %v1823 = vmul.f32 %v1811, %v1821
        %v1824 = vadd.f32 %v352, %v1822
        %v1825 = vadd.f32 %v354, %v1823
        %v1826 = vadd.f32 %v1824, %v1718
        %v1827 = vadd.f32 %v1825, %v1752
        %v1828 = vmul.f32 %v1826, 0.5
        %v1829 = vmul.f32 %v1827, 0.5
        %v1830 = vtanh.pop %v1828
        %v1831 = vtanh.pop %v1829
        %v1832 = vmul.f32 %v1830, 0.5
        %v1833 = vmul.f32 %v1831, 0.5
        %v1834 = vadd.f32 %v1832, 0.5
        %v1835 = vadd.f32 %v1833, 0.5
        %v1836 = vtanh.pop %v1826
        %v1837 = vtanh.pop %v1827
        %v1838 = vmul.f32 %v1834, %v1682
        %v1839 = vmul.f32 %v1835, %v1683
        %1842 = vrot.lane.b32.xlu0 %v1836, 64
        %v1843 = vpop.permute.xlu0 %1842
        %1844 = vrot.lane.b32.xlu0 %v1837, 64
        %v1845 = vpop.permute.xlu0 %1844
        %v1848 = vmul.f32 %v1834, %v1843
        %v1849 = vmul.f32 %v1835, %v1845
        %1852 = vrot.lane.b32.xlu0 %v1848, 32
        %v1853 = vpop.permute.xlu0 %1852
        %1854 = vrot.lane.b32.xlu0 %v1849, 32
        %v1855 = vpop.permute.xlu0 %1854
        %v1858 = vadd.f32 %v1838, %v1853
        %v1859 = vadd.f32 %v1839, %v1855
        %v1860 = vtanh.pop %v1858
        %v1861 = vtanh.pop %v1859
        %1864 = vrot.lane.b32.xlu0 %v1860, 64
        %v1865 = vpop.permute.xlu0 %1864
        %1866 = vrot.lane.b32.xlu0 %v1861, 64
        %v1867 = vpop.permute.xlu0 %1866
        %v1870 = vmul.f32 %v1834, %v1865
        %v1871 = vmul.f32 %v1835, %v1867
        %v1872 = vadd.f32 %v1870, %v635
        %v1873 = vadd.f32 %v1871, %v637
        %1876 = vrot.lane.b32.xlu0 %v1872, 32
        %v1877 = vpop.permute.xlu0 %1876
        %1878 = vrot.lane.b32.xlu0 %v1873, 32
        %v1879 = vpop.permute.xlu0 %1878
        %1882 = vst.msk [vmem:[%s278] sm:$0xff] %vm338, %v1877
        %1883 = vst.msk [vmem:[%s278 + $0x8] sm:$0xff] %vm338, %v1879
        %s1884 = sand.u32 %s165, 1
        %s1885 = scalar_lea.sflag [#allocation4], %s1884
        %s1886 = sand.u32 %s165, 1
        %s1887 = smul.addr %s1886, 16
        %s1888 = scalar_lea.vmem [#allocation5], %s1887
        // Predicated region
        $region49: #{tpu_custom_call.1} parent=43 // pred_check
          %p1889 = pneg %p175
        $region50: #{tpu_custom_call.1} parent=43 // pred_check_branch
          %1891 = sbr.rel (%p1889) target = $region52
        $region51: #{tpu_custom_call.1} parent=43 // pred_region
          %s1892 = smul.u32 2, %s21
          %1894 = vsyncadd %s1885, 0
          %s1895 = smul.addr %s1892, 8
          %s1896 = scalar_lea.hbm %s6, %s1895
          %s1897 = sshll.u32 %s1888, 4
          %s1898 = int_to_ptr.vmem [resolvable:$true] %s1897
          %s1899 = sshll.u32 %s1896, 4
          %s1900 = int_to_ptr.hbm [resolvable:$true] %s1899
          %1905 = dma.vmem_to_hbm [thread:$0]  %s1898, 256, %s1900, %s1885, 128, 128, 8
        $region52: #{tpu_custom_call.1} parent=43 // pred_fallthru
          _
      $region44: #{tpu_custom_call.1} parent=5 // pred_fallthru
        _
      %p1906 = scmp.le.s32.totalorder 2, %s16
      // Predicated region
      $region53: #{tpu_custom_call.1} parent=5 // pred_check
        %p1907 = pneg %p1906
      $region54: #{tpu_custom_call.1} parent=5 // pred_check_branch
        %1909 = sbr.rel (%p1907) target = $region56
      $region55: #{tpu_custom_call.1} parent=5 // pred_region
        %s1910 = ssub.s32 %s16, 2
        // Predicated region
        $region57: #{tpu_custom_call.1} parent=55 // pred_check
          %p1911 = pneg %p181
        $region58: #{tpu_custom_call.1} parent=55 // pred_check_branch
          %1913 = sbr.rel (%p1911) target = $region60
        $region59: #{tpu_custom_call.1} parent=55 // pred_region
          %s1914 = sand.u32 %s166, 1
          %s1915 = scalar_lea.sflag [#allocation4], %s1914
          %s1916 = sand.u32 %s166, 1
          %s1917 = smul.addr %s1916, 16
          %s1918 = scalar_lea.vmem [#allocation5], %s1917
          %1920 = dma.done %s1915, 256
        $region60: #{tpu_custom_call.1} parent=55 // pred_fallthru
          _
      $region56: #{tpu_custom_call.1} parent=5 // pred_fallthru
        _
    $region6: #{tpu_custom_call.1} parent=1 // loop_footer
      %s20 = sadd.s32 1, %s16
    $region7: #{tpu_custom_call.1} parent=1 // loop_footer_branch
      %15 = sbr.rel target = $region3
    $region8: #{tpu_custom_call.1} parent=1 // loop_exit
      _
    %1921 = vsyncpa [#allocation3], 1
    %s1922 = scalar_lea.sflag [#allocation3], 1
    %1923 = vsyncpa %s1922, 1
    %1924 = vsyncpa [#allocation4], 1
    %s1925 = scalar_lea.sflag [#allocation4], 1
    %1926 = vsyncpa %s1925, 1

</llo_original>
